<compile_context>
chip_gen: v5e
topology: v5e:2x2
jax: 0.10.0
libtpu: 0.0.40
codegen_flags: <defaults>
</compile_context>

<pallas_src>
import functools

import jax
import jax.numpy as jnp
from jax import lax
from jax.experimental import pallas as pl
from jax.experimental.pallas import tpu as pltpu

LANE = 128
_UNROLL_MAX_STEPS = 64   # fully unroll the in-kernel time loop up to this T


def _round_up(x, m):
    return (x + m - 1) // m * m


# -----------------------------------------------------------------------------
# Pallas kernel: whole-sequence GRU encoder, single grid step, in-kernel loop.
# -----------------------------------------------------------------------------
def _encoder_gru_seq_kernel(tok_ref,     # SMEM (T,) int32      scalar-prefetched tokens
                            gi_tab_ref,  # VMEM (Vp, 3*Hp)      pre-projected emb@W_i + fused biases
                            w_h_ref,     # VMEM (Hp, 3*Hp)      fused [Whr | Whz | Whn]
                            b_hn_ref,    # VMEM (1, Hp)         hidden-side n-gate bias
                            h0_ref,      # VMEM (1, Hp)         initial hidden
                            out_ref):    # VMEM (T, Hp)         per-step hidden states
    T, Hp = out_ref.shape
    b_hn = b_hn_ref[...]                       # 1 vreg, hoisted out of the loop

    def step(t, h):
        tok = tok_ref[t]
        # Input-path gates: pure row lookup (pre-projected at prepare time).
        gi = gi_tab_ref[pl.ds(tok, 1), :]                                 # (1, 3Hp)
        # Single MXU dot on the serial critical path.
        gh = jnp.dot(h, w_h_ref[...], preferred_element_type=jnp.float32)  # (1, 3Hp)

        # PyTorch nn.GRU equations (gate order r, z, n); slices lane-aligned.
        r = jax.nn.sigmoid(gi[:, 0:Hp] + gh[:, 0:Hp])
        z = jax.nn.sigmoid(gi[:, Hp:2 * Hp] + gh[:, Hp:2 * Hp])
        n = jnp.tanh(gi[:, 2 * Hp:3 * Hp] + r * (gh[:, 2 * Hp:3 * Hp] + b_hn))

        h_new = (1.0 - z) * n + z * h
        out_ref[pl.ds(t, 1), :] = h_new
        return h_new

    if T <= _UNROLL_MAX_STEPS:
        # Static unroll: static SMEM reads / VMEM stores, full LLO visibility.
        h = h0_ref[...]
        for t in range(T):
            h = step(t, h)
    else:
        lax.fori_loop(0, T, step, h0_ref[...])


def encoder_gru_sequence_pallas(tokens, h0, kparams):
    """tokens: (T,) int32, h0: (1, Hp) f32 -> (T, Hp) f32 per-step hidden states."""
    T = tokens.shape[0]
    Hp = h0.shape[-1]
    Vp = kparams["gi_table"].shape[0]

    const2 = lambda i, tok: (0, 0)

    grid_spec = pltpu.PrefetchScalarGridSpec(
        num_scalar_prefetch=1,
        grid=(1,),                                   # whole sequence in one step
        in_specs=[
            pl.BlockSpec((Vp, 3 * Hp), const2),      # pre-projected table (resident)
            pl.BlockSpec((Hp, 3 * Hp), const2),      # fused hidden weights (resident)
            pl.BlockSpec((1, Hp), const2),           # b_hn
            pl.BlockSpec((1, Hp), const2),           # initial hidden
        ],
        out_specs=pl.BlockSpec((T, Hp), const2),     # full (T, Hp) lane-dense block
    )

    return pl.pallas_call(
        _encoder_gru_seq_kernel,
        out_shape=jax.ShapeDtypeStruct((T, Hp), jnp.float32),
        grid_spec=grid_spec,
        compiler_params=pltpu.CompilerParams(
            dimension_semantics=("arbitrary",)),     # recurrence is serial
    )(tokens, kparams["gi_table"], kparams["w_h"], kparams["b_hn"], h0)


# -----------------------------------------------------------------------------
# Parameter construction.
# -----------------------------------------------------------------------------
def init_params(key, input_size, embedding_size, hidden_size):
    """Logical (unfused, unpadded) parameters, PyTorch-equivalent shapes stored
       transposed to (in_features, out_features). Embedding ~ N(0,1);
       GRU ~ U(-1/sqrt(H), 1/sqrt(H))."""
    keys = jax.random.split(key, 13)
    k = 1.0 / jnp.sqrt(jnp.float32(hidden_size))

    def uni(kk, shape):
        return jax.random.uniform(kk, shape, jnp.float32, minval=-k, maxval=k)

    return {
        "embedding": jax.random.normal(keys[0], (input_size, embedding_size), jnp.float32),
        "w_ir": uni(keys[1], (embedding_size, hidden_size)),
        "w_iz": uni(keys[2], (embedding_size, hidden_size)),
        "w_in": uni(keys[3], (embedding_size, hidden_size)),
        "w_hr": uni(keys[4], (hidden_size, hidden_size)),
        "w_hz": uni(keys[5], (hidden_size, hidden_size)),
        "w_hn": uni(keys[6], (hidden_size, hidden_size)),
        "b_ir": uni(keys[7], (1, hidden_size)),
        "b_iz": uni(keys[8], (1, hidden_size)),
        "b_in": uni(keys[9], (1, hidden_size)),
        "b_hr": uni(keys[10], (1, hidden_size)),
        "b_hz": uni(keys[11], (1, hidden_size)),
        "b_hn": uni(keys[12], (1, hidden_size)),
    }


def prepare_kernel_params(params, embedding_size, hidden_size):
    """Fuse gates, pre-project the input path into the embedding table, and
       zero-pad H to a lane multiple (128). Padding is self-consistent: padded
       hidden lanes stay exactly zero for all steps (gi/gh/b padded lanes are 0
       -> r=z=0.5, n=0 -> h_pad stays 0)."""
    H = hidden_size
    Hp = _round_up(H, LANE)
    V = params["embedding"].shape[0]
    Vp = _round_up(V, 8)

    def pad_cols(a):                      # (r, H) -> (r, Hp)
        return jnp.pad(a, ((0, 0), (0, Hp - a.shape[1])))

    # Fused input-side weights (E, 3Hp) and fused biases (1, 3Hp).
    w_i = jnp.concatenate([pad_cols(params["w_ir"]),
                           pad_cols(params["w_iz"]),
                           pad_cols(params["w_in"])], axis=-1)
    b_i = jnp.concatenate([pad_cols(params["b_ir"] + params["b_hr"]),
                           pad_cols(params["b_iz"] + params["b_hz"]),
                           pad_cols(params["b_in"])], axis=-1)

    # Pre-projected table: input-path gate pre-activations per token id.
    gi_table = params["embedding"] @ w_i + b_i                  # (V, 3Hp)
    gi_table = jnp.pad(gi_table, ((0, Vp - V), (0, 0)))          # (Vp, 3Hp)

    def pad_hh(a):                        # (H, H) -> (Hp, Hp)
        return jnp.pad(a, ((0, Hp - a.shape[0]), (0, Hp - a.shape[1])))

    w_h = jnp.concatenate([pad_hh(params["w_hr"]),
                           pad_hh(params["w_hz"]),
                           pad_hh(params["w_hn"])], axis=-1)     # (Hp, 3Hp)
    b_hn = pad_cols(params["b_hn"])                              # (1, Hp)

    return {"gi_table": gi_table.astype(jnp.float32),
            "w_h": w_h.astype(jnp.float32),
            "b_hn": b_hn.astype(jnp.float32)}


# -----------------------------------------------------------------------------
# Public wrappers (module-equivalent semantics).
# -----------------------------------------------------------------------------
@functools.partial(jax.jit, static_argnames=("hidden_size",))
def encoder_rnn_encode(tokens, hidden0, kparams, hidden_size):
    """Run the whole token sequence in ONE pallas_call.
       tokens: (T,) int, hidden0: (1,1,H) -> (outputs (T,1,H), hidden (1,1,H))."""
    H = hidden_size
    Hp = kparams["w_h"].shape[0]
    Vp = kparams["gi_table"].shape[0]
    toks = jnp.clip(tokens.astype(jnp.int32), 0, Vp - 1)   # no VMEM OOB reads
    h0 = jnp.zeros((1, Hp), jnp.float32).at[:, :H].set(hidden0.reshape(1, H))
    hs = encoder_gru_sequence_pallas(toks, h0, kparams)    # (T, Hp)
    outputs = hs[:, :H].reshape(-1, 1, H)
    hidden_final = outputs[-1][None]                        # (1, 1, H)
    return outputs, hidden_final


def encoder_rnn_forward(token, hidden, kparams, hidden_size):
    """EncoderRNN.forward(input, hidden) equivalent (single token step).
       Returns (output, hidden), both (1, 1, H), with output == hidden."""
    outputs, hidden_new = encoder_rnn_encode(
        jnp.reshape(token, (1,)).astype(jnp.int32), hidden, kparams, hidden_size)
    return outputs.reshape(1, 1, hidden_size), hidden_new


# -----------------------------------------------------------------------------
# Pure-JAX reference (PyTorch nn.GRU equations) for correctness checking.
# -----------------------------------------------------------------------------
def encoder_rnn_reference(tokens, hidden0, params, hidden_size):
    H = hidden_size

    def step(h, tok):
        x = params["embedding"][tok][None, :]
        r = jax.nn.sigmoid(x @ params["w_ir"] + params["b_ir"]
                           + h @ params["w_hr"] + params["b_hr"])
        z = jax.nn.sigmoid(x @ params["w_iz"] + params["b_iz"]
                           + h @ params["w_hz"] + params["b_hz"])
        n = jnp.tanh(x @ params["w_in"] + params["b_in"]
                     + r * (h @ params["w_hn"] + params["b_hn"]))
        h_new = (1.0 - z) * n + z * h
        return h_new, h_new

    h_last, hs = lax.scan(step, hidden0.reshape(1, H), tokens)
    return hs.reshape(-1, 1, H), h_last.reshape(1, 1, H)


if __name__ == "__main__":
    input_size = 16        # vocabulary size
    embedding_size = 32
    hidden_size = 32
    seq_len = 8

    key = jax.random.PRNGKey(0)
    key_params, key_tokens = jax.random.split(key)

    params = init_params(key_params, input_size, embedding_size, hidden_size)
    kparams = prepare_kernel_params(params, embedding_size, hidden_size)

    tokens = jax.random.randint(key_tokens, (seq_len,), 0, input_size, dtype=jnp.int32)
    hidden0 = jnp.zeros((1, 1, hidden_size), dtype=jnp.float32)   # initHidden()

    # Whole sequence: single kernel launch, in-kernel time loop, resident weights.
    outputs, hidden_T = encoder_rnn_encode(tokens, hidden0, kparams, hidden_size)
    jax.block_until_ready((outputs, hidden_T))

    # Single-step forward, exactly matching the PyTorch module's forward().
    out1, hid1 = encoder_rnn_forward(tokens[0], hidden0, kparams, hidden_size)
    jax.block_until_ready((out1, hid1))

    # Reference check.
    ref_outputs, ref_hidden = encoder_rnn_reference(tokens, hidden0, params, hidden_size)

    assert outputs.shape == (seq_len, 1, hidden_size)
    assert hidden_T.shape == (1, 1, hidden_size)
    assert out1.shape == (1, 1, hidden_size)
    assert hid1.shape == (1, 1, hidden_size)
    assert jnp.allclose(outputs, ref_outputs, atol=1e-5, rtol=1e-5)
    assert jnp.allclose(hidden_T, ref_hidden, atol=1e-5, rtol=1e-5)
    assert jnp.allclose(out1, ref_outputs[0:1], atol=1e-5, rtol=1e-5)

    print("KERNEL_OK")
</pallas_src>

<mosaic_0001>
module attributes {stable_mosaic.version = 11 : i64} {
  func.func @_encoder_gru_seq_kernel(%arg0: i32, %arg1: memref<8xi32, #tpu.memory_space<smem>>, %arg2: memref<16x384xf32, #tpu.memory_space<vmem>>, %arg3: memref<128x384xf32, #tpu.memory_space<vmem>>, %arg4: memref<1x128xf32, #tpu.memory_space<vmem>>, %arg5: memref<1x128xf32, #tpu.memory_space<vmem>>, %arg6: memref<8x128xf32, #tpu.memory_space<vmem>>) attributes {dimension_semantics = [#tpu.dimension_semantics<arbitrary>], iteration_bounds = array<i64: 1>, scalar_prefetch = 1 : i64, scratch_operands = 0 : i64, tpu.core_type = #tpu.core_type<tc>, window_params = [{pipeline_mode = #tpu.pipeline_mode<synchronous>, transform_indices = @transform_0, window_bounds = array<i64: 16, 384>}, {pipeline_mode = #tpu.pipeline_mode<synchronous>, transform_indices = @transform_1, window_bounds = array<i64: 128, 384>}, {pipeline_mode = #tpu.pipeline_mode<synchronous>, transform_indices = @transform_2, window_bounds = array<i64: 1, 128>}, {pipeline_mode = #tpu.pipeline_mode<synchronous>, transform_indices = @transform_3, window_bounds = array<i64: 1, 128>}, {pipeline_mode = #tpu.pipeline_mode<synchronous>, transform_indices = @transform_4, window_bounds = array<i64: 8, 128>}]} {
    %c0 = arith.constant 0 : index
    %c0_0 = arith.constant 0 : index
    %0 = vector.load %arg4[%c0, %c0_0] : memref<1x128xf32, #tpu.memory_space<vmem>>, vector<1x128xf32>
    %c0_1 = arith.constant 0 : index
    %c0_2 = arith.constant 0 : index
    %1 = vector.load %arg5[%c0_1, %c0_2] : memref<1x128xf32, #tpu.memory_space<vmem>>, vector<1x128xf32>
    %c0_3 = arith.constant 0 : index
    %2 = memref.load %arg1[%c0_3] : memref<8xi32, #tpu.memory_space<smem>>
    %3 = arith.index_cast %2 : i32 to index
    %c0_4 = arith.constant 0 : index
    %4 = vector.load %arg2[%3, %c0_4] : memref<16x384xf32, #tpu.memory_space<vmem>>, vector<1x384xf32>
    %c0_5 = arith.constant 0 : index
    %c0_6 = arith.constant 0 : index
    %5 = vector.load %arg3[%c0_5, %c0_6] : memref<128x384xf32, #tpu.memory_space<vmem>>, vector<128x384xf32>
    %cst = arith.constant dense<0.000000e+00> : vector<1x384xf32>
    %6 = tpu.matmul %1, %5, %cst {dimension_numbers = #tpu.dot_dimension_numbers<[1], [0], [0], [1], [0, 0, 1, 1], [], []>} : vector<1x128xf32>, vector<128x384xf32>, vector<1x384xf32> -> vector<1x384xf32>
    %7 = vector.extract_strided_slice %4 {offsets = [0, 0], sizes = [1, 128], strides = [1, 1]} : vector<1x384xf32> to vector<1x128xf32>
    %8 = vector.extract_strided_slice %6 {offsets = [0, 0], sizes = [1, 128], strides = [1, 1]} : vector<1x384xf32> to vector<1x128xf32>
    %9 = arith.addf %7, %8 : vector<1x128xf32>
    %10 = arith.negf %9 : vector<1x128xf32>
    %11 = math.exp %10 : vector<1x128xf32>
    %cst_7 = arith.constant 1.000000e+00 : f32
    %12 = vector.broadcast %cst_7 : f32 to vector<1x128xf32>
    %13 = arith.addf %12, %11 : vector<1x128xf32>
    %14 = arith.divf %12, %13 : vector<1x128xf32>
    %15 = vector.extract_strided_slice %4 {offsets = [0, 128], sizes = [1, 128], strides = [1, 1]} : vector<1x384xf32> to vector<1x128xf32>
    %16 = vector.extract_strided_slice %6 {offsets = [0, 128], sizes = [1, 128], strides = [1, 1]} : vector<1x384xf32> to vector<1x128xf32>
    %17 = arith.addf %15, %16 : vector<1x128xf32>
    %18 = arith.negf %17 : vector<1x128xf32>
    %19 = math.exp %18 : vector<1x128xf32>
    %cst_8 = arith.constant 1.000000e+00 : f32
    %20 = vector.broadcast %cst_8 : f32 to vector<1x128xf32>
    %21 = arith.addf %20, %19 : vector<1x128xf32>
    %22 = arith.divf %20, %21 : vector<1x128xf32>
    %23 = vector.extract_strided_slice %4 {offsets = [0, 256], sizes = [1, 128], strides = [1, 1]} : vector<1x384xf32> to vector<1x128xf32>
    %24 = vector.extract_strided_slice %6 {offsets = [0, 256], sizes = [1, 128], strides = [1, 1]} : vector<1x384xf32> to vector<1x128xf32>
    %25 = arith.addf %24, %0 : vector<1x128xf32>
    %26 = arith.mulf %14, %25 : vector<1x128xf32>
    %27 = arith.addf %23, %26 : vector<1x128xf32>
    %28 = math.tanh %27 : vector<1x128xf32>
    %cst_9 = arith.constant 1.000000e+00 : f32
    %29 = vector.broadcast %cst_9 : f32 to vector<1x128xf32>
    %30 = arith.subf %29, %22 : vector<1x128xf32>
    %31 = arith.mulf %30, %28 : vector<1x128xf32>
    %32 = arith.mulf %22, %1 : vector<1x128xf32>
    %33 = arith.addf %31, %32 : vector<1x128xf32>
    %c0_10 = arith.constant 0 : index
    %c0_11 = arith.constant 0 : index
    %34 = vector.load %arg6[%c0_10, %c0_11] : memref<8x128xf32, #tpu.memory_space<vmem>>, vector<1x128xf32>
    tpu.vector_store %arg6[%c0_10, %c0_11], %33 {strides = array<i32>} : memref<8x128xf32, #tpu.memory_space<vmem>>, vector<1x128xf32>,
    %c1 = arith.constant 1 : index
    %35 = memref.load %arg1[%c1] : memref<8xi32, #tpu.memory_space<smem>>
    %36 = arith.index_cast %35 : i32 to index
    %c0_12 = arith.constant 0 : index
    %37 = vector.load %arg2[%36, %c0_12] : memref<16x384xf32, #tpu.memory_space<vmem>>, vector<1x384xf32>
    %c0_13 = arith.constant 0 : index
    %c0_14 = arith.constant 0 : index
    %38 = vector.load %arg3[%c0_13, %c0_14] : memref<128x384xf32, #tpu.memory_space<vmem>>, vector<128x384xf32>
    %cst_15 = arith.constant dense<0.000000e+00> : vector<1x384xf32>
    %39 = tpu.matmul %33, %38, %cst_15 {dimension_numbers = #tpu.dot_dimension_numbers<[1], [0], [0], [1], [0, 0, 1, 1], [], []>} : vector<1x128xf32>, vector<128x384xf32>, vector<1x384xf32> -> vector<1x384xf32>
    %40 = vector.extract_strided_slice %37 {offsets = [0, 0], sizes = [1, 128], strides = [1, 1]} : vector<1x384xf32> to vector<1x128xf32>
    %41 = vector.extract_strided_slice %39 {offsets = [0, 0], sizes = [1, 128], strides = [1, 1]} : vector<1x384xf32> to vector<1x128xf32>
    %42 = arith.addf %40, %41 : vector<1x128xf32>
    %43 = arith.negf %42 : vector<1x128xf32>
    %44 = math.exp %43 : vector<1x128xf32>
    %cst_16 = arith.constant 1.000000e+00 : f32
    %45 = vector.broadcast %cst_16 : f32 to vector<1x128xf32>
    %46 = arith.addf %45, %44 : vector<1x128xf32>
    %47 = arith.divf %45, %46 : vector<1x128xf32>
    %48 = vector.extract_strided_slice %37 {offsets = [0, 128], sizes = [1, 128], strides = [1, 1]} : vector<1x384xf32> to vector<1x128xf32>
    %49 = vector.extract_strided_slice %39 {offsets = [0, 128], sizes = [1, 128], strides = [1, 1]} : vector<1x384xf32> to vector<1x128xf32>
    %50 = arith.addf %48, %49 : vector<1x128xf32>
    %51 = arith.negf %50 : vector<1x128xf32>
    %52 = math.exp %51 : vector<1x128xf32>
    %cst_17 = arith.constant 1.000000e+00 : f32
    %53 = vector.broadcast %cst_17 : f32 to vector<1x128xf32>
    %54 = arith.addf %53, %52 : vector<1x128xf32>
    %55 = arith.divf %53, %54 : vector<1x128xf32>
    %56 = vector.extract_strided_slice %37 {offsets = [0, 256], sizes = [1, 128], strides = [1, 1]} : vector<1x384xf32> to vector<1x128xf32>
    %57 = vector.extract_strided_slice %39 {offsets = [0, 256], sizes = [1, 128], strides = [1, 1]} : vector<1x384xf32> to vector<1x128xf32>
    %58 = arith.addf %57, %0 : vector<1x128xf32>
    %59 = arith.mulf %47, %58 : vector<1x128xf32>
    %60 = arith.addf %56, %59 : vector<1x128xf32>
    %61 = math.tanh %60 : vector<1x128xf32>
    %cst_18 = arith.constant 1.000000e+00 : f32
    %62 = vector.broadcast %cst_18 : f32 to vector<1x128xf32>
    %63 = arith.subf %62, %55 : vector<1x128xf32>
    %64 = arith.mulf %63, %61 : vector<1x128xf32>
    %65 = arith.mulf %55, %33 : vector<1x128xf32>
    %66 = arith.addf %64, %65 : vector<1x128xf32>
    %c1_19 = arith.constant 1 : index
    %c0_20 = arith.constant 0 : index
    %67 = vector.load %arg6[%c1_19, %c0_20] : memref<8x128xf32, #tpu.memory_space<vmem>>, vector<1x128xf32>
    tpu.vector_store %arg6[%c1_19, %c0_20], %66 {strides = array<i32>} : memref<8x128xf32, #tpu.memory_space<vmem>>, vector<1x128xf32>,
    %c2 = arith.constant 2 : index
    %68 = memref.load %arg1[%c2] : memref<8xi32, #tpu.memory_space<smem>>
    %69 = arith.index_cast %68 : i32 to index
    %c0_21 = arith.constant 0 : index
    %70 = vector.load %arg2[%69, %c0_21] : memref<16x384xf32, #tpu.memory_space<vmem>>, vector<1x384xf32>
    %c0_22 = arith.constant 0 : index
    %c0_23 = arith.constant 0 : index
    %71 = vector.load %arg3[%c0_22, %c0_23] : memref<128x384xf32, #tpu.memory_space<vmem>>, vector<128x384xf32>
    %cst_24 = arith.constant dense<0.000000e+00> : vector<1x384xf32>
    %72 = tpu.matmul %66, %71, %cst_24 {dimension_numbers = #tpu.dot_dimension_numbers<[1], [0], [0], [1], [0, 0, 1, 1], [], []>} : vector<1x128xf32>, vector<128x384xf32>, vector<1x384xf32> -> vector<1x384xf32>
    %73 = vector.extract_strided_slice %70 {offsets = [0, 0], sizes = [1, 128], strides = [1, 1]} : vector<1x384xf32> to vector<1x128xf32>
    %74 = vector.extract_strided_slice %72 {offsets = [0, 0], sizes = [1, 128], strides = [1, 1]} : vector<1x384xf32> to vector<1x128xf32>
    %75 = arith.addf %73, %74 : vector<1x128xf32>
    %76 = arith.negf %75 : vector<1x128xf32>
    %77 = math.exp %76 : vector<1x128xf32>
    %cst_25 = arith.constant 1.000000e+00 : f32
    %78 = vector.broadcast %cst_25 : f32 to vector<1x128xf32>
    %79 = arith.addf %78, %77 : vector<1x128xf32>
    %80 = arith.divf %78, %79 : vector<1x128xf32>
    %81 = vector.extract_strided_slice %70 {offsets = [0, 128], sizes = [1, 128], strides = [1, 1]} : vector<1x384xf32> to vector<1x128xf32>
    %82 = vector.extract_strided_slice %72 {offsets = [0, 128], sizes = [1, 128], strides = [1, 1]} : vector<1x384xf32> to vector<1x128xf32>
    %83 = arith.addf %81, %82 : vector<1x128xf32>
    %84 = arith.negf %83 : vector<1x128xf32>
    %85 = math.exp %84 : vector<1x128xf32>
    %cst_26 = arith.constant 1.000000e+00 : f32
    %86 = vector.broadcast %cst_26 : f32 to vector<1x128xf32>
    %87 = arith.addf %86, %85 : vector<1x128xf32>
    %88 = arith.divf %86, %87 : vector<1x128xf32>
    %89 = vector.extract_strided_slice %70 {offsets = [0, 256], sizes = [1, 128], strides = [1, 1]} : vector<1x384xf32> to vector<1x128xf32>
    %90 = vector.extract_strided_slice %72 {offsets = [0, 256], sizes = [1, 128], strides = [1, 1]} : vector<1x384xf32> to vector<1x128xf32>
    %91 = arith.addf %90, %0 : vector<1x128xf32>
    %92 = arith.mulf %80, %91 : vector<1x128xf32>
    %93 = arith.addf %89, %92 : vector<1x128xf32>
    %94 = math.tanh %93 : vector<1x128xf32>
    %cst_27 = arith.constant 1.000000e+00 : f32
    %95 = vector.broadcast %cst_27 : f32 to vector<1x128xf32>
    %96 = arith.subf %95, %88 : vector<1x128xf32>
    %97 = arith.mulf %96, %94 : vector<1x128xf32>
    %98 = arith.mulf %88, %66 : vector<1x128xf32>
    %99 = arith.addf %97, %98 : vector<1x128xf32>
    %c2_28 = arith.constant 2 : index
    %c0_29 = arith.constant 0 : index
    %100 = vector.load %arg6[%c2_28, %c0_29] : memref<8x128xf32, #tpu.memory_space<vmem>>, vector<1x128xf32>
    tpu.vector_store %arg6[%c2_28, %c0_29], %99 {strides = array<i32>} : memref<8x128xf32, #tpu.memory_space<vmem>>, vector<1x128xf32>,
    %c3 = arith.constant 3 : index
    %101 = memref.load %arg1[%c3] : memref<8xi32, #tpu.memory_space<smem>>
    %102 = arith.index_cast %101 : i32 to index
    %c0_30 = arith.constant 0 : index
    %103 = vector.load %arg2[%102, %c0_30] : memref<16x384xf32, #tpu.memory_space<vmem>>, vector<1x384xf32>
    %c0_31 = arith.constant 0 : index
    %c0_32 = arith.constant 0 : index
    %104 = vector.load %arg3[%c0_31, %c0_32] : memref<128x384xf32, #tpu.memory_space<vmem>>, vector<128x384xf32>
    %cst_33 = arith.constant dense<0.000000e+00> : vector<1x384xf32>
    %105 = tpu.matmul %99, %104, %cst_33 {dimension_numbers = #tpu.dot_dimension_numbers<[1], [0], [0], [1], [0, 0, 1, 1], [], []>} : vector<1x128xf32>, vector<128x384xf32>, vector<1x384xf32> -> vector<1x384xf32>
    %106 = vector.extract_strided_slice %103 {offsets = [0, 0], sizes = [1, 128], strides = [1, 1]} : vector<1x384xf32> to vector<1x128xf32>
    %107 = vector.extract_strided_slice %105 {offsets = [0, 0], sizes = [1, 128], strides = [1, 1]} : vector<1x384xf32> to vector<1x128xf32>
    %108 = arith.addf %106, %107 : vector<1x128xf32>
    %109 = arith.negf %108 : vector<1x128xf32>
    %110 = math.exp %109 : vector<1x128xf32>
    %cst_34 = arith.constant 1.000000e+00 : f32
    %111 = vector.broadcast %cst_34 : f32 to vector<1x128xf32>
    %112 = arith.addf %111, %110 : vector<1x128xf32>
    %113 = arith.divf %111, %112 : vector<1x128xf32>
    %114 = vector.extract_strided_slice %103 {offsets = [0, 128], sizes = [1, 128], strides = [1, 1]} : vector<1x384xf32> to vector<1x128xf32>
    %115 = vector.extract_strided_slice %105 {offsets = [0, 128], sizes = [1, 128], strides = [1, 1]} : vector<1x384xf32> to vector<1x128xf32>
    %116 = arith.addf %114, %115 : vector<1x128xf32>
    %117 = arith.negf %116 : vector<1x128xf32>
    %118 = math.exp %117 : vector<1x128xf32>
    %cst_35 = arith.constant 1.000000e+00 : f32
    %119 = vector.broadcast %cst_35 : f32 to vector<1x128xf32>
    %120 = arith.addf %119, %118 : vector<1x128xf32>
    %121 = arith.divf %119, %120 : vector<1x128xf32>
    %122 = vector.extract_strided_slice %103 {offsets = [0, 256], sizes = [1, 128], strides = [1, 1]} : vector<1x384xf32> to vector<1x128xf32>
    %123 = vector.extract_strided_slice %105 {offsets = [0, 256], sizes = [1, 128], strides = [1, 1]} : vector<1x384xf32> to vector<1x128xf32>
    %124 = arith.addf %123, %0 : vector<1x128xf32>
    %125 = arith.mulf %113, %124 : vector<1x128xf32>
    %126 = arith.addf %122, %125 : vector<1x128xf32>
    %127 = math.tanh %126 : vector<1x128xf32>
    %cst_36 = arith.constant 1.000000e+00 : f32
    %128 = vector.broadcast %cst_36 : f32 to vector<1x128xf32>
    %129 = arith.subf %128, %121 : vector<1x128xf32>
    %130 = arith.mulf %129, %127 : vector<1x128xf32>
    %131 = arith.mulf %121, %99 : vector<1x128xf32>
    %132 = arith.addf %130, %131 : vector<1x128xf32>
    %c3_37 = arith.constant 3 : index
    %c0_38 = arith.constant 0 : index
    %133 = vector.load %arg6[%c3_37, %c0_38] : memref<8x128xf32, #tpu.memory_space<vmem>>, vector<1x128xf32>
    tpu.vector_store %arg6[%c3_37, %c0_38], %132 {strides = array<i32>} : memref<8x128xf32, #tpu.memory_space<vmem>>, vector<1x128xf32>,
    %c4 = arith.constant 4 : index
    %134 = memref.load %arg1[%c4] : memref<8xi32, #tpu.memory_space<smem>>
    %135 = arith.index_cast %134 : i32 to index
    %c0_39 = arith.constant 0 : index
    %136 = vector.load %arg2[%135, %c0_39] : memref<16x384xf32, #tpu.memory_space<vmem>>, vector<1x384xf32>
    %c0_40 = arith.constant 0 : index
    %c0_41 = arith.constant 0 : index
    %137 = vector.load %arg3[%c0_40, %c0_41] : memref<128x384xf32, #tpu.memory_space<vmem>>, vector<128x384xf32>
    %cst_42 = arith.constant dense<0.000000e+00> : vector<1x384xf32>
    %138 = tpu.matmul %132, %137, %cst_42 {dimension_numbers = #tpu.dot_dimension_numbers<[1], [0], [0], [1], [0, 0, 1, 1], [], []>} : vector<1x128xf32>, vector<128x384xf32>, vector<1x384xf32> -> vector<1x384xf32>
    %139 = vector.extract_strided_slice %136 {offsets = [0, 0], sizes = [1, 128], strides = [1, 1]} : vector<1x384xf32> to vector<1x128xf32>
    %140 = vector.extract_strided_slice %138 {offsets = [0, 0], sizes = [1, 128], strides = [1, 1]} : vector<1x384xf32> to vector<1x128xf32>
    %141 = arith.addf %139, %140 : vector<1x128xf32>
    %142 = arith.negf %141 : vector<1x128xf32>
    %143 = math.exp %142 : vector<1x128xf32>
    %cst_43 = arith.constant 1.000000e+00 : f32
    %144 = vector.broadcast %cst_43 : f32 to vector<1x128xf32>
    %145 = arith.addf %144, %143 : vector<1x128xf32>
    %146 = arith.divf %144, %145 : vector<1x128xf32>
    %147 = vector.extract_strided_slice %136 {offsets = [0, 128], sizes = [1, 128], strides = [1, 1]} : vector<1x384xf32> to vector<1x128xf32>
    %148 = vector.extract_strided_slice %138 {offsets = [0, 128], sizes = [1, 128], strides = [1, 1]} : vector<1x384xf32> to vector<1x128xf32>
    %149 = arith.addf %147, %148 : vector<1x128xf32>
    %150 = arith.negf %149 : vector<1x128xf32>
    %151 = math.exp %150 : vector<1x128xf32>
    %cst_44 = arith.constant 1.000000e+00 : f32
    %152 = vector.broadcast %cst_44 : f32 to vector<1x128xf32>
    %153 = arith.addf %152, %151 : vector<1x128xf32>
    %154 = arith.divf %152, %153 : vector<1x128xf32>
    %155 = vector.extract_strided_slice %136 {offsets = [0, 256], sizes = [1, 128], strides = [1, 1]} : vector<1x384xf32> to vector<1x128xf32>
    %156 = vector.extract_strided_slice %138 {offsets = [0, 256], sizes = [1, 128], strides = [1, 1]} : vector<1x384xf32> to vector<1x128xf32>
    %157 = arith.addf %156, %0 : vector<1x128xf32>
    %158 = arith.mulf %146, %157 : vector<1x128xf32>
    %159 = arith.addf %155, %158 : vector<1x128xf32>
    %160 = math.tanh %159 : vector<1x128xf32>
    %cst_45 = arith.constant 1.000000e+00 : f32
    %161 = vector.broadcast %cst_45 : f32 to vector<1x128xf32>
    %162 = arith.subf %161, %154 : vector<1x128xf32>
    %163 = arith.mulf %162, %160 : vector<1x128xf32>
    %164 = arith.mulf %154, %132 : vector<1x128xf32>
    %165 = arith.addf %163, %164 : vector<1x128xf32>
    %c4_46 = arith.constant 4 : index
    %c0_47 = arith.constant 0 : index
    %166 = vector.load %arg6[%c4_46, %c0_47] : memref<8x128xf32, #tpu.memory_space<vmem>>, vector<1x128xf32>
    tpu.vector_store %arg6[%c4_46, %c0_47], %165 {strides = array<i32>} : memref<8x128xf32, #tpu.memory_space<vmem>>, vector<1x128xf32>,
    %c5 = arith.constant 5 : index
    %167 = memref.load %arg1[%c5] : memref<8xi32, #tpu.memory_space<smem>>
    %168 = arith.index_cast %167 : i32 to index
    %c0_48 = arith.constant 0 : index
    %169 = vector.load %arg2[%168, %c0_48] : memref<16x384xf32, #tpu.memory_space<vmem>>, vector<1x384xf32>
    %c0_49 = arith.constant 0 : index
    %c0_50 = arith.constant 0 : index
    %170 = vector.load %arg3[%c0_49, %c0_50] : memref<128x384xf32, #tpu.memory_space<vmem>>, vector<128x384xf32>
    %cst_51 = arith.constant dense<0.000000e+00> : vector<1x384xf32>
    %171 = tpu.matmul %165, %170, %cst_51 {dimension_numbers = #tpu.dot_dimension_numbers<[1], [0], [0], [1], [0, 0, 1, 1], [], []>} : vector<1x128xf32>, vector<128x384xf32>, vector<1x384xf32> -> vector<1x384xf32>
    %172 = vector.extract_strided_slice %169 {offsets = [0, 0], sizes = [1, 128], strides = [1, 1]} : vector<1x384xf32> to vector<1x128xf32>
    %173 = vector.extract_strided_slice %171 {offsets = [0, 0], sizes = [1, 128], strides = [1, 1]} : vector<1x384xf32> to vector<1x128xf32>
    %174 = arith.addf %172, %173 : vector<1x128xf32>
    %175 = arith.negf %174 : vector<1x128xf32>
    %176 = math.exp %175 : vector<1x128xf32>
    %cst_52 = arith.constant 1.000000e+00 : f32
    %177 = vector.broadcast %cst_52 : f32 to vector<1x128xf32>
    %178 = arith.addf %177, %176 : vector<1x128xf32>
    %179 = arith.divf %177, %178 : vector<1x128xf32>
    %180 = vector.extract_strided_slice %169 {offsets = [0, 128], sizes = [1, 128], strides = [1, 1]} : vector<1x384xf32> to vector<1x128xf32>
    %181 = vector.extract_strided_slice %171 {offsets = [0, 128], sizes = [1, 128], strides = [1, 1]} : vector<1x384xf32> to vector<1x128xf32>
    %182 = arith.addf %180, %181 : vector<1x128xf32>
    %183 = arith.negf %182 : vector<1x128xf32>
    %184 = math.exp %183 : vector<1x128xf32>
    %cst_53 = arith.constant 1.000000e+00 : f32
    %185 = vector.broadcast %cst_53 : f32 to vector<1x128xf32>
    %186 = arith.addf %185, %184 : vector<1x128xf32>
    %187 = arith.divf %185, %186 : vector<1x128xf32>
    %188 = vector.extract_strided_slice %169 {offsets = [0, 256], sizes = [1, 128], strides = [1, 1]} : vector<1x384xf32> to vector<1x128xf32>
    %189 = vector.extract_strided_slice %171 {offsets = [0, 256], sizes = [1, 128], strides = [1, 1]} : vector<1x384xf32> to vector<1x128xf32>
    %190 = arith.addf %189, %0 : vector<1x128xf32>
    %191 = arith.mulf %179, %190 : vector<1x128xf32>
    %192 = arith.addf %188, %191 : vector<1x128xf32>
    %193 = math.tanh %192 : vector<1x128xf32>
    %cst_54 = arith.constant 1.000000e+00 : f32
    %194 = vector.broadcast %cst_54 : f32 to vector<1x128xf32>
    %195 = arith.subf %194, %187 : vector<1x128xf32>
    %196 = arith.mulf %195, %193 : vector<1x128xf32>
    %197 = arith.mulf %187, %165 : vector<1x128xf32>
    %198 = arith.addf %196, %197 : vector<1x128xf32>
    %c5_55 = arith.constant 5 : index
    %c0_56 = arith.constant 0 : index
    %199 = vector.load %arg6[%c5_55, %c0_56] : memref<8x128xf32, #tpu.memory_space<vmem>>, vector<1x128xf32>
    tpu.vector_store %arg6[%c5_55, %c0_56], %198 {strides = array<i32>} : memref<8x128xf32, #tpu.memory_space<vmem>>, vector<1x128xf32>,
    %c6 = arith.constant 6 : index
    %200 = memref.load %arg1[%c6] : memref<8xi32, #tpu.memory_space<smem>>
    %201 = arith.index_cast %200 : i32 to index
    %c0_57 = arith.constant 0 : index
    %202 = vector.load %arg2[%201, %c0_57] : memref<16x384xf32, #tpu.memory_space<vmem>>, vector<1x384xf32>
    %c0_58 = arith.constant 0 : index
    %c0_59 = arith.constant 0 : index
    %203 = vector.load %arg3[%c0_58, %c0_59] : memref<128x384xf32, #tpu.memory_space<vmem>>, vector<128x384xf32>
    %cst_60 = arith.constant dense<0.000000e+00> : vector<1x384xf32>
    %204 = tpu.matmul %198, %203, %cst_60 {dimension_numbers = #tpu.dot_dimension_numbers<[1], [0], [0], [1], [0, 0, 1, 1], [], []>} : vector<1x128xf32>, vector<128x384xf32>, vector<1x384xf32> -> vector<1x384xf32>
    %205 = vector.extract_strided_slice %202 {offsets = [0, 0], sizes = [1, 128], strides = [1, 1]} : vector<1x384xf32> to vector<1x128xf32>
    %206 = vector.extract_strided_slice %204 {offsets = [0, 0], sizes = [1, 128], strides = [1, 1]} : vector<1x384xf32> to vector<1x128xf32>
    %207 = arith.addf %205, %206 : vector<1x128xf32>
    %208 = arith.negf %207 : vector<1x128xf32>
    %209 = math.exp %208 : vector<1x128xf32>
    %cst_61 = arith.constant 1.000000e+00 : f32
    %210 = vector.broadcast %cst_61 : f32 to vector<1x128xf32>
    %211 = arith.addf %210, %209 : vector<1x128xf32>
    %212 = arith.divf %210, %211 : vector<1x128xf32>
    %213 = vector.extract_strided_slice %202 {offsets = [0, 128], sizes = [1, 128], strides = [1, 1]} : vector<1x384xf32> to vector<1x128xf32>
    %214 = vector.extract_strided_slice %204 {offsets = [0, 128], sizes = [1, 128], strides = [1, 1]} : vector<1x384xf32> to vector<1x128xf32>
    %215 = arith.addf %213, %214 : vector<1x128xf32>
    %216 = arith.negf %215 : vector<1x128xf32>
    %217 = math.exp %216 : vector<1x128xf32>
    %cst_62 = arith.constant 1.000000e+00 : f32
    %218 = vector.broadcast %cst_62 : f32 to vector<1x128xf32>
    %219 = arith.addf %218, %217 : vector<1x128xf32>
    %220 = arith.divf %218, %219 : vector<1x128xf32>
    %221 = vector.extract_strided_slice %202 {offsets = [0, 256], sizes = [1, 128], strides = [1, 1]} : vector<1x384xf32> to vector<1x128xf32>
    %222 = vector.extract_strided_slice %204 {offsets = [0, 256], sizes = [1, 128], strides = [1, 1]} : vector<1x384xf32> to vector<1x128xf32>
    %223 = arith.addf %222, %0 : vector<1x128xf32>
    %224 = arith.mulf %212, %223 : vector<1x128xf32>
    %225 = arith.addf %221, %224 : vector<1x128xf32>
    %226 = math.tanh %225 : vector<1x128xf32>
    %cst_63 = arith.constant 1.000000e+00 : f32
    %227 = vector.broadcast %cst_63 : f32 to vector<1x128xf32>
    %228 = arith.subf %227, %220 : vector<1x128xf32>
    %229 = arith.mulf %228, %226 : vector<1x128xf32>
    %230 = arith.mulf %220, %198 : vector<1x128xf32>
    %231 = arith.addf %229, %230 : vector<1x128xf32>
    %c6_64 = arith.constant 6 : index
    %c0_65 = arith.constant 0 : index
    %232 = vector.load %arg6[%c6_64, %c0_65] : memref<8x128xf32, #tpu.memory_space<vmem>>, vector<1x128xf32>
    tpu.vector_store %arg6[%c6_64, %c0_65], %231 {strides = array<i32>} : memref<8x128xf32, #tpu.memory_space<vmem>>, vector<1x128xf32>,
    %c7 = arith.constant 7 : index
    %233 = memref.load %arg1[%c7] : memref<8xi32, #tpu.memory_space<smem>>
    %234 = arith.index_cast %233 : i32 to index
    %c0_66 = arith.constant 0 : index
    %235 = vector.load %arg2[%234, %c0_66] : memref<16x384xf32, #tpu.memory_space<vmem>>, vector<1x384xf32>
    %c0_67 = arith.constant 0 : index
    %c0_68 = arith.constant 0 : index
    %236 = vector.load %arg3[%c0_67, %c0_68] : memref<128x384xf32, #tpu.memory_space<vmem>>, vector<128x384xf32>
    %cst_69 = arith.constant dense<0.000000e+00> : vector<1x384xf32>
    %237 = tpu.matmul %231, %236, %cst_69 {dimension_numbers = #tpu.dot_dimension_numbers<[1], [0], [0], [1], [0, 0, 1, 1], [], []>} : vector<1x128xf32>, vector<128x384xf32>, vector<1x384xf32> -> vector<1x384xf32>
    %238 = vector.extract_strided_slice %235 {offsets = [0, 0], sizes = [1, 128], strides = [1, 1]} : vector<1x384xf32> to vector<1x128xf32>
    %239 = vector.extract_strided_slice %237 {offsets = [0, 0], sizes = [1, 128], strides = [1, 1]} : vector<1x384xf32> to vector<1x128xf32>
    %240 = arith.addf %238, %239 : vector<1x128xf32>
    %241 = arith.negf %240 : vector<1x128xf32>
    %242 = math.exp %241 : vector<1x128xf32>
    %cst_70 = arith.constant 1.000000e+00 : f32
    %243 = vector.broadcast %cst_70 : f32 to vector<1x128xf32>
    %244 = arith.addf %243, %242 : vector<1x128xf32>
    %245 = arith.divf %243, %244 : vector<1x128xf32>
    %246 = vector.extract_strided_slice %235 {offsets = [0, 128], sizes = [1, 128], strides = [1, 1]} : vector<1x384xf32> to vector<1x128xf32>
    %247 = vector.extract_strided_slice %237 {offsets = [0, 128], sizes = [1, 128], strides = [1, 1]} : vector<1x384xf32> to vector<1x128xf32>
    %248 = arith.addf %246, %247 : vector<1x128xf32>
    %249 = arith.negf %248 : vector<1x128xf32>
    %250 = math.exp %249 : vector<1x128xf32>
    %cst_71 = arith.constant 1.000000e+00 : f32
    %251 = vector.broadcast %cst_71 : f32 to vector<1x128xf32>
    %252 = arith.addf %251, %250 : vector<1x128xf32>
    %253 = arith.divf %251, %252 : vector<1x128xf32>
    %254 = vector.extract_strided_slice %235 {offsets = [0, 256], sizes = [1, 128], strides = [1, 1]} : vector<1x384xf32> to vector<1x128xf32>
    %255 = vector.extract_strided_slice %237 {offsets = [0, 256], sizes = [1, 128], strides = [1, 1]} : vector<1x384xf32> to vector<1x128xf32>
    %256 = arith.addf %255, %0 : vector<1x128xf32>
    %257 = arith.mulf %245, %256 : vector<1x128xf32>
    %258 = arith.addf %254, %257 : vector<1x128xf32>
    %259 = math.tanh %258 : vector<1x128xf32>
    %cst_72 = arith.constant 1.000000e+00 : f32
    %260 = vector.broadcast %cst_72 : f32 to vector<1x128xf32>
    %261 = arith.subf %260, %253 : vector<1x128xf32>
    %262 = arith.mulf %261, %259 : vector<1x128xf32>
    %263 = arith.mulf %253, %231 : vector<1x128xf32>
    %264 = arith.addf %262, %263 : vector<1x128xf32>
    %c7_73 = arith.constant 7 : index
    %c0_74 = arith.constant 0 : index
    %265 = vector.load %arg6[%c7_73, %c0_74] : memref<8x128xf32, #tpu.memory_space<vmem>>, vector<1x128xf32>
    tpu.vector_store %arg6[%c7_73, %c0_74], %264 {strides = array<i32>} : memref<8x128xf32, #tpu.memory_space<vmem>>, vector<1x128xf32>,
    return
  }
  func.func @transform_0(%arg0: i32, %arg1: memref<8xi32, #tpu.memory_space<smem>>) -> (i32, i32) {
    %c0_i32 = arith.constant 0 : i32
    %c0_i32_0 = arith.constant 0 : i32
    %c0_i32_1 = arith.constant 0 : i32
    return %c0_i32, %c0_i32_0 : i32, i32
  }
  func.func @transform_1(%arg0: i32, %arg1: memref<8xi32, #tpu.memory_space<smem>>) -> (i32, i32) {
    %c0_i32 = arith.constant 0 : i32
    %c0_i32_0 = arith.constant 0 : i32
    %c0_i32_1 = arith.constant 0 : i32
    return %c0_i32, %c0_i32_0 : i32, i32
  }
  func.func @transform_2(%arg0: i32, %arg1: memref<8xi32, #tpu.memory_space<smem>>) -> (i32, i32) {
    %c0_i32 = arith.constant 0 : i32
    %c0_i32_0 = arith.constant 0 : i32
    %c0_i32_1 = arith.constant 0 : i32
    return %c0_i32, %c0_i32_0 : i32, i32
  }
  func.func @transform_3(%arg0: i32, %arg1: memref<8xi32, #tpu.memory_space<smem>>) -> (i32, i32) {
    %c0_i32 = arith.constant 0 : i32
    %c0_i32_0 = arith.constant 0 : i32
    %c0_i32_1 = arith.constant 0 : i32
    return %c0_i32, %c0_i32_0 : i32, i32
  }
  func.func @transform_4(%arg0: i32, %arg1: memref<8xi32, #tpu.memory_space<smem>>) -> (i32, i32) {
    %c0_i32 = arith.constant 0 : i32
    %c0_i32_0 = arith.constant 0 : i32
    %c0_i32_1 = arith.constant 0 : i32
    return %c0_i32, %c0_i32_0 : i32, i32
  }
}

</mosaic_0001>

<llo_original>
// kernel: encoder_rnn_encode.1
$region0: #{encoder_rnn_encode.1}
  #allocation0 [shape = 'u32[]', space=smem, size = 0x4, offset = 0x4, fixed_abs, tag = 'smem constant byte address 0x4 - core index']
  #allocation1 [shape = 'u32[72,128]{1,0:T(1,128)}', space=vmem, size = 0x9000, scoped, tag = 'internal scratch']
  #allocation2 [shape = 's32[1]{0}', space=sflag, size = 0x4, scoped, tag = 'scoped memory for encoder_rnn_encode.1']
  #allocation3 [shape = 'u8[512]{0}', space=smem, size = 0x200, scoped, tag = 'prefetched SMEM operand 0']
  %s0 = inlined_call_operand.vmem [shape: s32[8], index: 0, kind: input, shape index: {}]
  %s1 = inlined_call_operand.hbm [shape: f32[16,384], index: 1, kind: input, shape index: {}]
  %s2 = inlined_call_operand.hbm [shape: f32[128,384], index: 2, kind: input, shape index: {}]
  %s3 = inlined_call_operand.vmem [shape: f32[1,128], index: 3, kind: input, shape index: {}]
  %s4 = inlined_call_operand.vmem [shape: f32[1,128], index: 4, kind: input, shape index: {}]
  %s5 = inlined_call_operand.vmem [shape: f32[8,128], index: 5, kind: output, shape index: {}]
  %s6 = sld [smem:[#allocation0]]
  $region34: #{encoder_rnn_encode.1} parent=0
    _
  %s8 = ssub.s32 1, %s6
  %s9 = scalar_select 0, %s8, %s6
  %s11 = sshll.u32 %s0, 4
  %s12 = int_to_ptr.vmem [resolvable:$true] %s11
  %14 = dma.vmem_to_smem %s12, 16, [#allocation3], [#allocation2]
  %16 = dma.done [#allocation2], 16
  %17 = sfence
  $region1: #{encoder_rnn_encode.1} parent=0
    #allocation4 [shape = 'u8[24576]{0}', space=vmem, size = 0x6000, scoped, tag = 'input window, operand 1, single buffered']
    #allocation5 [shape = 's32[1]{0}', space=sflag, size = 0x4, scoped, tag = 'scoped memory for encoder_rnn_encode.1']
    #allocation6 [shape = 'u8[196608]{0}', space=vmem, size = 0x30000, scoped, tag = 'input window, operand 2, single buffered']
    #allocation7 [shape = 's32[1]{0}', space=sflag, size = 0x4, scoped, tag = 'scoped memory for encoder_rnn_encode.1']
    %18 = vsyncpa [#allocation5], 0
    %19 = vsyncpa [#allocation7], 0
    // Predicated region
    $region2: #{encoder_rnn_encode.1} parent=1 // pred_check
      _
    $region3: #{encoder_rnn_encode.1} parent=1 // pred_check_branch
      %21 = sbr.rel (0) target = $region5
    $region4: #{encoder_rnn_encode.1} parent=1 // pred_region
      %23 = vsyncadd [#allocation5], 0
      %s24 = sshll.u32 %s1, 4
      %s25 = int_to_ptr.hbm [resolvable:$true] %s24
      %s26 = sshll.u32 [#allocation4], 4
      %s27 = int_to_ptr.vmem [resolvable:$true] %s26
      %32 = dma.hbm_to_vmem [thread:$0]  %s25, 768, %s27, [#allocation5], 384, 384, 24
    $region5: #{encoder_rnn_encode.1} parent=1 // pred_fallthru
      _
    // Predicated region
    $region6: #{encoder_rnn_encode.1} parent=1 // pred_check
      _
    $region7: #{encoder_rnn_encode.1} parent=1 // pred_check_branch
      %34 = sbr.rel (0) target = $region9
    $region8: #{encoder_rnn_encode.1} parent=1 // pred_region
      %36 = vsyncadd [#allocation7], 0
      %s37 = sshll.u32 %s2, 4
      %s38 = int_to_ptr.hbm [resolvable:$true] %s37
      %s39 = sshll.u32 [#allocation6], 4
      %s40 = int_to_ptr.vmem [resolvable:$true] %s39
      %45 = dma.hbm_to_vmem [thread:$0]  %s38, 6144, %s40, [#allocation7], 384, 384, 24
    $region9: #{encoder_rnn_encode.1} parent=1 // pred_fallthru
      _
    // Predicated region
    $region10: #{encoder_rnn_encode.1} parent=1 // pred_check
      _
    $region11: #{encoder_rnn_encode.1} parent=1 // pred_check_branch
      %47 = sbr.rel (0) target = $region13
    $region12: #{encoder_rnn_encode.1} parent=1 // pred_region
      _
    $region13: #{encoder_rnn_encode.1} parent=1 // pred_fallthru
      _
    // Predicated region
    $region14: #{encoder_rnn_encode.1} parent=1 // pred_check
      _
    $region15: #{encoder_rnn_encode.1} parent=1 // pred_check_branch
      %49 = sbr.rel (0) target = $region17
    $region16: #{encoder_rnn_encode.1} parent=1 // pred_region
      _
    $region17: #{encoder_rnn_encode.1} parent=1 // pred_fallthru
      _
    // Predicated region
    $region18: #{encoder_rnn_encode.1} parent=1 // pred_check
      _
    $region19: #{encoder_rnn_encode.1} parent=1 // pred_check_branch
      %51 = sbr.rel (0) target = $region21
    $region20: #{encoder_rnn_encode.1} parent=1 // pred_region
      %53 = dma.done [#allocation5], 768
    $region21: #{encoder_rnn_encode.1} parent=1 // pred_fallthru
      _
    // Predicated region
    $region22: #{encoder_rnn_encode.1} parent=1 // pred_check
      _
    $region23: #{encoder_rnn_encode.1} parent=1 // pred_check_branch
      %55 = sbr.rel (0) target = $region25
    $region24: #{encoder_rnn_encode.1} parent=1 // pred_region
      %57 = dma.done [#allocation7], 6144
    $region25: #{encoder_rnn_encode.1} parent=1 // pred_fallthru
      _
    %v58 = vld [vmem:[%s3] sm:$0x1]
    %v59 = vld [vmem:[%s4] sm:$0x1]
    %s60 = sld [smem:[#allocation3]]
    %s61 = sshra.s32 %s60, 3
    %s62 = sand.u32 %s60, 7
    %s63 = sshra.s32 %s60, 3
    %s64 = sand.u32 %s60, 7
    %s65 = smul.u32 %s61, 3
    %s66 = smul.u32 %s65, 8
    %s67 = sadd.s32 %s66, %s64
    %s68 = scalar_lea.vmem [#allocation4], %s67
    %v69 = vld [vmem:[%s68] ss:$8 sm:$0x7]
    %v70 = vld [vmem:[#allocation6] sm:$0xff]
    %v71 = vld [vmem:[#allocation6 + $0x8] sm:$0xff]
    %v72 = vld [vmem:[#allocation6 + $0x10] sm:$0xff]
    %v73 = vld [vmem:[#allocation6 + $0x18] sm:$0xff]
    %v74 = vld [vmem:[#allocation6 + $0x20] sm:$0xff]
    %v75 = vld [vmem:[#allocation6 + $0x28] sm:$0xff]
    %v76 = vld [vmem:[#allocation6 + $0x30] sm:$0xff]
    %v77 = vld [vmem:[#allocation6 + $0x38] sm:$0xff]
    %v78 = vld [vmem:[#allocation6 + $0x40] sm:$0xff]
    %v79 = vld [vmem:[#allocation6 + $0x48] sm:$0xff]
    %v80 = vld [vmem:[#allocation6 + $0x50] sm:$0xff]
    %v81 = vld [vmem:[#allocation6 + $0x58] sm:$0xff]
    %v82 = vld [vmem:[#allocation6 + $0x60] sm:$0xff]
    %v83 = vld [vmem:[#allocation6 + $0x68] sm:$0xff]
    %v84 = vld [vmem:[#allocation6 + $0x70] sm:$0xff]
    %v85 = vld [vmem:[#allocation6 + $0x78] sm:$0xff]
    %v86 = vld [vmem:[#allocation6 + $0x80] sm:$0xff]
    %v87 = vld [vmem:[#allocation6 + $0x88] sm:$0xff]
    %v88 = vld [vmem:[#allocation6 + $0x90] sm:$0xff]
    %v89 = vld [vmem:[#allocation6 + $0x98] sm:$0xff]
    %v90 = vld [vmem:[#allocation6 + $0xa0] sm:$0xff]
    %v91 = vld [vmem:[#allocation6 + $0xa8] sm:$0xff]
    %v92 = vld [vmem:[#allocation6 + $0xb0] sm:$0xff]
    %v93 = vld [vmem:[#allocation6 + $0xb8] sm:$0xff]
    %v94 = vld [vmem:[#allocation6 + $0xc0] sm:$0xff]
    %v95 = vld [vmem:[#allocation6 + $0xc8] sm:$0xff]
    %v96 = vld [vmem:[#allocation6 + $0xd0] sm:$0xff]
    %v97 = vld [vmem:[#allocation6 + $0xd8] sm:$0xff]
    %v98 = vld [vmem:[#allocation6 + $0xe0] sm:$0xff]
    %v99 = vld [vmem:[#allocation6 + $0xe8] sm:$0xff]
    %v100 = vld [vmem:[#allocation6 + $0xf0] sm:$0xff]
    %v101 = vld [vmem:[#allocation6 + $0xf8] sm:$0xff]
    %v102 = vld [vmem:[#allocation6 + $0x100] sm:$0xff]
    %v103 = vld [vmem:[#allocation6 + $0x108] sm:$0xff]
    %v104 = vld [vmem:[#allocation6 + $0x110] sm:$0xff]
    %v105 = vld [vmem:[#allocation6 + $0x118] sm:$0xff]
    %v106 = vld [vmem:[#allocation6 + $0x120] sm:$0xff]
    %v107 = vld [vmem:[#allocation6 + $0x128] sm:$0xff]
    %v108 = vld [vmem:[#allocation6 + $0x130] sm:$0xff]
    %v109 = vld [vmem:[#allocation6 + $0x138] sm:$0xff]
    %v110 = vld [vmem:[#allocation6 + $0x140] sm:$0xff]
    %v111 = vld [vmem:[#allocation6 + $0x148] sm:$0xff]
    %v112 = vld [vmem:[#allocation6 + $0x150] sm:$0xff]
    %v113 = vld [vmem:[#allocation6 + $0x158] sm:$0xff]
    %v114 = vld [vmem:[#allocation6 + $0x160] sm:$0xff]
    %v115 = vld [vmem:[#allocation6 + $0x168] sm:$0xff]
    %v116 = vld [vmem:[#allocation6 + $0x170] sm:$0xff]
    %v117 = vld [vmem:[#allocation6 + $0x178] sm:$0xff]
    %118 = vmatpush.msra.mxu0 %v115
    %119 = vmatpush.msra.mxu0 %v112
    %120 = vmatpush.msra.mxu0 %v109
    %121 = vmatpush.msra.mxu0 %v106
    %122 = vmatpush.msra.mxu0 %v103
    %123 = vmatpush.msra.mxu0 %v100
    %124 = vmatpush.msra.mxu0 %v97
    %125 = vmatpush.msra.mxu0 %v94
    %126 = vmatpush.msra.mxu0 %v91
    %127 = vmatpush.msra.mxu0 %v88
    %128 = vmatpush.msra.mxu0 %v85
    %129 = vmatpush.msra.mxu0 %v82
    %130 = vmatpush.msra.mxu0 %v79
    %131 = vmatpush.msra.mxu0 %v76
    %132 = vmatpush.msra.mxu0 %v73
    %133 = vmatpush.msra.mxu0 %v70
    %134 = vmatmul.f32.gmra.mxu0 %v59
    %v135 = vpop.f32.mrf.mxu0
    %v136 = vadd.f32 0.0, %v135
    %137 = vdwg.mxu0
    %138 = vmatpush.msra.mxu0 %v116
    %139 = vmatpush.msra.mxu0 %v113
    %140 = vmatpush.msra.mxu0 %v110
    %141 = vmatpush.msra.mxu0 %v107
    %142 = vmatpush.msra.mxu0 %v104
    %143 = vmatpush.msra.mxu0 %v101
    %144 = vmatpush.msra.mxu0 %v98
    %145 = vmatpush.msra.mxu0 %v95
    %146 = vmatpush.msra.mxu0 %v92
    %147 = vmatpush.msra.mxu0 %v89
    %148 = vmatpush.msra.mxu0 %v86
    %149 = vmatpush.msra.mxu0 %v83
    %150 = vmatpush.msra.mxu0 %v80
    %151 = vmatpush.msra.mxu0 %v77
    %152 = vmatpush.msra.mxu0 %v74
    %153 = vmatpush.msra.mxu0 %v71
    %154 = vmatmul.f32.gmra.mxu0 %v59
    %v155 = vpop.f32.mrf.mxu0
    %v156 = vadd.f32 0.0, %v155
    %157 = vdwg.mxu0
    %158 = vmatpush.msra.mxu0 %v117
    %159 = vmatpush.msra.mxu0 %v114
    %160 = vmatpush.msra.mxu0 %v111
    %161 = vmatpush.msra.mxu0 %v108
    %162 = vmatpush.msra.mxu0 %v105
    %163 = vmatpush.msra.mxu0 %v102
    %164 = vmatpush.msra.mxu0 %v99
    %165 = vmatpush.msra.mxu0 %v96
    %166 = vmatpush.msra.mxu0 %v93
    %167 = vmatpush.msra.mxu0 %v90
    %168 = vmatpush.msra.mxu0 %v87
    %169 = vmatpush.msra.mxu0 %v84
    %170 = vmatpush.msra.mxu0 %v81
    %171 = vmatpush.msra.mxu0 %v78
    %172 = vmatpush.msra.mxu0 %v75
    %173 = vmatpush.msra.mxu0 %v72
    %174 = vmatmul.f32.gmra.mxu0 %v59
    %v175 = vpop.f32.mrf.mxu0
    %v176 = vadd.f32 0.0, %v175
    %177 = vdwg.mxu0
    %v178 = vadd.f32 %v69, %v136
    %v179 = vxor.u32 %v178, 2147483648
    %v180 = vmul.f32 %v179, 1.442695
    %v181 = vpow.pop %v180
    %v182 = vadd.f32 %v181, 1.0
    %v183 = vrcp.pop %v182
    %v184 = vmul.f32 %v182, %v183
    %v185 = vsub.f32 1.0, %v184
    %v186 = vmul.f32 %v183, %v185
    %v187 = vadd.f32 %v183, %v186
    %vm188 = vweird.f32 %v182
    %vm189 = vweird.f32 %v183
    %vm190 = vmor %vm188, %vm189
    %v191 = vsel %vm190, %v183, %v187
    %v192 = vand.u32 2147483647, %v182
    %vm193 = vcmp.eq.f32.partialorder %v192, 8.507059e+37
    %v194 = vand.u32 %v182, 2147483648
    %v195 = vor.u32 1.1754944e-38, %v194
    %v196 = vsel %vm193, %v195, %v191
    %v197 = vmul.f32 1.0, %v196
    %v199 = vrot.slane %v69, 1
    %v201 = vadd.f32 %v199, %v156
    %v202 = vxor.u32 %v201, 2147483648
    %v203 = vmul.f32 %v202, 1.442695
    %v204 = vpow.pop %v203
    %v205 = vadd.f32 %v204, 1.0
    %v206 = vrcp.pop %v205
    %v207 = vmul.f32 %v205, %v206
    %v208 = vsub.f32 1.0, %v207
    %v209 = vmul.f32 %v206, %v208
    %v210 = vadd.f32 %v206, %v209
    %vm211 = vweird.f32 %v205
    %vm212 = vweird.f32 %v206
    %vm213 = vmor %vm211, %vm212
    %v214 = vsel %vm213, %v206, %v210
    %v215 = vand.u32 2147483647, %v205
    %vm216 = vcmp.eq.f32.partialorder %v215, 8.507059e+37
    %v217 = vand.u32 %v205, 2147483648
    %v218 = vor.u32 1.1754944e-38, %v217
    %v219 = vsel %vm216, %v218, %v214
    %v220 = vmul.f32 1.0, %v219
    %v221 = vadd.f32 %v176, %v58
    %v222 = vmul.f32 %v197, %v221
    %v223 = vrot.slane %v69, 2
    %v225 = vadd.f32 %v223, %v222
    %v226 = vtanh.pop %v225
    %v227 = vsub.f32 1.0, %v220
    %v228 = vmul.f32 %v227, %v226
    %v229 = vmul.f32 %v220, %v59
    %v230 = vadd.f32 %v228, %v229
    %231 = vst [vmem:[%s5] sm:$0x1] %v230
    %s232 = sld [smem:[#allocation3 + $0x1]]
    %s233 = sshra.s32 %s232, 3
    %s234 = sand.u32 %s232, 7
    %s235 = sshra.s32 %s232, 3
    %s236 = sand.u32 %s232, 7
    %s237 = smul.u32 %s233, 3
    %s238 = smul.u32 %s237, 8
    %s239 = sadd.s32 %s238, %s236
    %s240 = scalar_lea.vmem [#allocation4], %s239
    %v241 = vld [vmem:[%s240] ss:$8 sm:$0x7]
    %v242 = vld [vmem:[#allocation6] sm:$0xff]
    %v243 = vld [vmem:[#allocation6 + $0x8] sm:$0xff]
    %v244 = vld [vmem:[#allocation6 + $0x10] sm:$0xff]
    %v245 = vld [vmem:[#allocation6 + $0x18] sm:$0xff]
    %v246 = vld [vmem:[#allocation6 + $0x20] sm:$0xff]
    %v247 = vld [vmem:[#allocation6 + $0x28] sm:$0xff]
    %v248 = vld [vmem:[#allocation6 + $0x30] sm:$0xff]
    %v249 = vld [vmem:[#allocation6 + $0x38] sm:$0xff]
    %v250 = vld [vmem:[#allocation6 + $0x40] sm:$0xff]
    %v251 = vld [vmem:[#allocation6 + $0x48] sm:$0xff]
    %v252 = vld [vmem:[#allocation6 + $0x50] sm:$0xff]
    %v253 = vld [vmem:[#allocation6 + $0x58] sm:$0xff]
    %v254 = vld [vmem:[#allocation6 + $0x60] sm:$0xff]
    %v255 = vld [vmem:[#allocation6 + $0x68] sm:$0xff]
    %v256 = vld [vmem:[#allocation6 + $0x70] sm:$0xff]
    %v257 = vld [vmem:[#allocation6 + $0x78] sm:$0xff]
    %v258 = vld [vmem:[#allocation6 + $0x80] sm:$0xff]
    %v259 = vld [vmem:[#allocation6 + $0x88] sm:$0xff]
    %v260 = vld [vmem:[#allocation6 + $0x90] sm:$0xff]
    %v261 = vld [vmem:[#allocation6 + $0x98] sm:$0xff]
    %v262 = vld [vmem:[#allocation6 + $0xa0] sm:$0xff]
    %v263 = vld [vmem:[#allocation6 + $0xa8] sm:$0xff]
    %v264 = vld [vmem:[#allocation6 + $0xb0] sm:$0xff]
    %v265 = vld [vmem:[#allocation6 + $0xb8] sm:$0xff]
    %v266 = vld [vmem:[#allocation6 + $0xc0] sm:$0xff]
    %v267 = vld [vmem:[#allocation6 + $0xc8] sm:$0xff]
    %v268 = vld [vmem:[#allocation6 + $0xd0] sm:$0xff]
    %v269 = vld [vmem:[#allocation6 + $0xd8] sm:$0xff]
    %v270 = vld [vmem:[#allocation6 + $0xe0] sm:$0xff]
    %v271 = vld [vmem:[#allocation6 + $0xe8] sm:$0xff]
    %v272 = vld [vmem:[#allocation6 + $0xf0] sm:$0xff]
    %v273 = vld [vmem:[#allocation6 + $0xf8] sm:$0xff]
    %v274 = vld [vmem:[#allocation6 + $0x100] sm:$0xff]
    %v275 = vld [vmem:[#allocation6 + $0x108] sm:$0xff]
    %v276 = vld [vmem:[#allocation6 + $0x110] sm:$0xff]
    %v277 = vld [vmem:[#allocation6 + $0x118] sm:$0xff]
    %v278 = vld [vmem:[#allocation6 + $0x120] sm:$0xff]
    %v279 = vld [vmem:[#allocation6 + $0x128] sm:$0xff]
    %v280 = vld [vmem:[#allocation6 + $0x130] sm:$0xff]
    %v281 = vld [vmem:[#allocation6 + $0x138] sm:$0xff]
    %v282 = vld [vmem:[#allocation6 + $0x140] sm:$0xff]
    %v283 = vld [vmem:[#allocation6 + $0x148] sm:$0xff]
    %v284 = vld [vmem:[#allocation6 + $0x150] sm:$0xff]
    %v285 = vld [vmem:[#allocation6 + $0x158] sm:$0xff]
    %v286 = vld [vmem:[#allocation6 + $0x160] sm:$0xff]
    %v287 = vld [vmem:[#allocation6 + $0x168] sm:$0xff]
    %v288 = vld [vmem:[#allocation6 + $0x170] sm:$0xff]
    %v289 = vld [vmem:[#allocation6 + $0x178] sm:$0xff]
    %290 = vmatpush.msra.mxu0 %v287
    %291 = vmatpush.msra.mxu0 %v284
    %292 = vmatpush.msra.mxu0 %v281
    %293 = vmatpush.msra.mxu0 %v278
    %294 = vmatpush.msra.mxu0 %v275
    %295 = vmatpush.msra.mxu0 %v272
    %296 = vmatpush.msra.mxu0 %v269
    %297 = vmatpush.msra.mxu0 %v266
    %298 = vmatpush.msra.mxu0 %v263
    %299 = vmatpush.msra.mxu0 %v260
    %300 = vmatpush.msra.mxu0 %v257
    %301 = vmatpush.msra.mxu0 %v254
    %302 = vmatpush.msra.mxu0 %v251
    %303 = vmatpush.msra.mxu0 %v248
    %304 = vmatpush.msra.mxu0 %v245
    %305 = vmatpush.msra.mxu0 %v242
    %306 = vmatmul.f32.gmra.mxu0 %v230
    %v307 = vpop.f32.mrf.mxu0
    %v308 = vadd.f32 0.0, %v307
    %309 = vdwg.mxu0
    %310 = vmatpush.msra.mxu0 %v288
    %311 = vmatpush.msra.mxu0 %v285
    %312 = vmatpush.msra.mxu0 %v282
    %313 = vmatpush.msra.mxu0 %v279
    %314 = vmatpush.msra.mxu0 %v276
    %315 = vmatpush.msra.mxu0 %v273
    %316 = vmatpush.msra.mxu0 %v270
    %317 = vmatpush.msra.mxu0 %v267
    %318 = vmatpush.msra.mxu0 %v264
    %319 = vmatpush.msra.mxu0 %v261
    %320 = vmatpush.msra.mxu0 %v258
    %321 = vmatpush.msra.mxu0 %v255
    %322 = vmatpush.msra.mxu0 %v252
    %323 = vmatpush.msra.mxu0 %v249
    %324 = vmatpush.msra.mxu0 %v246
    %325 = vmatpush.msra.mxu0 %v243
    %326 = vmatmul.f32.gmra.mxu0 %v230
    %v327 = vpop.f32.mrf.mxu0
    %v328 = vadd.f32 0.0, %v327
    %329 = vdwg.mxu0
    %330 = vmatpush.msra.mxu0 %v289
    %331 = vmatpush.msra.mxu0 %v286
    %332 = vmatpush.msra.mxu0 %v283
    %333 = vmatpush.msra.mxu0 %v280
    %334 = vmatpush.msra.mxu0 %v277
    %335 = vmatpush.msra.mxu0 %v274
    %336 = vmatpush.msra.mxu0 %v271
    %337 = vmatpush.msra.mxu0 %v268
    %338 = vmatpush.msra.mxu0 %v265
    %339 = vmatpush.msra.mxu0 %v262
    %340 = vmatpush.msra.mxu0 %v259
    %341 = vmatpush.msra.mxu0 %v256
    %342 = vmatpush.msra.mxu0 %v253
    %343 = vmatpush.msra.mxu0 %v250
    %344 = vmatpush.msra.mxu0 %v247
    %345 = vmatpush.msra.mxu0 %v244
    %346 = vmatmul.f32.gmra.mxu0 %v230
    %v347 = vpop.f32.mrf.mxu0
    %v348 = vadd.f32 0.0, %v347
    %349 = vdwg.mxu0
    %v350 = vadd.f32 %v241, %v308
    %v351 = vxor.u32 %v350, 2147483648
    %v352 = vmul.f32 %v351, 1.442695
    %v353 = vpow.pop %v352
    %v354 = vadd.f32 %v353, 1.0
    %v355 = vrcp.pop %v354
    %v356 = vmul.f32 %v354, %v355
    %v357 = vsub.f32 1.0, %v356
    %v358 = vmul.f32 %v355, %v357
    %v359 = vadd.f32 %v355, %v358
    %vm360 = vweird.f32 %v354
    %vm361 = vweird.f32 %v355
    %vm362 = vmor %vm360, %vm361
    %v363 = vsel %vm362, %v355, %v359
    %v364 = vand.u32 2147483647, %v354
    %vm365 = vcmp.eq.f32.partialorder %v364, 8.507059e+37
    %v366 = vand.u32 %v354, 2147483648
    %v367 = vor.u32 1.1754944e-38, %v366
    %v368 = vsel %vm365, %v367, %v363
    %v369 = vmul.f32 1.0, %v368
    %v371 = vrot.slane %v241, 1
    %v373 = vadd.f32 %v371, %v328
    %v374 = vxor.u32 %v373, 2147483648
    %v375 = vmul.f32 %v374, 1.442695
    %v376 = vpow.pop %v375
    %v377 = vadd.f32 %v376, 1.0
    %v378 = vrcp.pop %v377
    %v379 = vmul.f32 %v377, %v378
    %v380 = vsub.f32 1.0, %v379
    %v381 = vmul.f32 %v378, %v380
    %v382 = vadd.f32 %v378, %v381
    %vm383 = vweird.f32 %v377
    %vm384 = vweird.f32 %v378
    %vm385 = vmor %vm383, %vm384
    %v386 = vsel %vm385, %v378, %v382
    %v387 = vand.u32 2147483647, %v377
    %vm388 = vcmp.eq.f32.partialorder %v387, 8.507059e+37
    %v389 = vand.u32 %v377, 2147483648
    %v390 = vor.u32 1.1754944e-38, %v389
    %v391 = vsel %vm388, %v390, %v386
    %v392 = vmul.f32 1.0, %v391
    %v393 = vadd.f32 %v348, %v58
    %v394 = vmul.f32 %v369, %v393
    %v395 = vrot.slane %v241, 2
    %v397 = vadd.f32 %v395, %v394
    %v398 = vtanh.pop %v397
    %v399 = vsub.f32 1.0, %v392
    %v400 = vmul.f32 %v399, %v398
    %v401 = vmul.f32 %v392, %v230
    %v402 = vadd.f32 %v400, %v401
    %403 = vst [vmem:[%s5 + $0x1] sm:$0x1] %v402
    %s404 = sld [smem:[#allocation3 + $0x2]]
    %s405 = sshra.s32 %s404, 3
    %s406 = sand.u32 %s404, 7
    %s407 = sshra.s32 %s404, 3
    %s408 = sand.u32 %s404, 7
    %s409 = smul.u32 %s405, 3
    %s410 = smul.u32 %s409, 8
    %s411 = sadd.s32 %s410, %s408
    %s412 = scalar_lea.vmem [#allocation4], %s411
    %v413 = vld [vmem:[%s412] ss:$8 sm:$0x7]
    %v414 = vld [vmem:[#allocation6] sm:$0xff]
    %v415 = vld [vmem:[#allocation6 + $0x8] sm:$0xff]
    %v416 = vld [vmem:[#allocation6 + $0x10] sm:$0xff]
    %v417 = vld [vmem:[#allocation6 + $0x18] sm:$0xff]
    %v418 = vld [vmem:[#allocation6 + $0x20] sm:$0xff]
    %v419 = vld [vmem:[#allocation6 + $0x28] sm:$0xff]
    %v420 = vld [vmem:[#allocation6 + $0x30] sm:$0xff]
    %v421 = vld [vmem:[#allocation6 + $0x38] sm:$0xff]
    %v422 = vld [vmem:[#allocation6 + $0x40] sm:$0xff]
    %v423 = vld [vmem:[#allocation6 + $0x48] sm:$0xff]
    %v424 = vld [vmem:[#allocation6 + $0x50] sm:$0xff]
    %v425 = vld [vmem:[#allocation6 + $0x58] sm:$0xff]
    %v426 = vld [vmem:[#allocation6 + $0x60] sm:$0xff]
    %v427 = vld [vmem:[#allocation6 + $0x68] sm:$0xff]
    %v428 = vld [vmem:[#allocation6 + $0x70] sm:$0xff]
    %v429 = vld [vmem:[#allocation6 + $0x78] sm:$0xff]
    %v430 = vld [vmem:[#allocation6 + $0x80] sm:$0xff]
    %v431 = vld [vmem:[#allocation6 + $0x88] sm:$0xff]
    %v432 = vld [vmem:[#allocation6 + $0x90] sm:$0xff]
    %v433 = vld [vmem:[#allocation6 + $0x98] sm:$0xff]
    %v434 = vld [vmem:[#allocation6 + $0xa0] sm:$0xff]
    %v435 = vld [vmem:[#allocation6 + $0xa8] sm:$0xff]
    %v436 = vld [vmem:[#allocation6 + $0xb0] sm:$0xff]
    %v437 = vld [vmem:[#allocation6 + $0xb8] sm:$0xff]
    %v438 = vld [vmem:[#allocation6 + $0xc0] sm:$0xff]
    %v439 = vld [vmem:[#allocation6 + $0xc8] sm:$0xff]
    %v440 = vld [vmem:[#allocation6 + $0xd0] sm:$0xff]
    %v441 = vld [vmem:[#allocation6 + $0xd8] sm:$0xff]
    %v442 = vld [vmem:[#allocation6 + $0xe0] sm:$0xff]
    %v443 = vld [vmem:[#allocation6 + $0xe8] sm:$0xff]
    %v444 = vld [vmem:[#allocation6 + $0xf0] sm:$0xff]
    %v445 = vld [vmem:[#allocation6 + $0xf8] sm:$0xff]
    %v446 = vld [vmem:[#allocation6 + $0x100] sm:$0xff]
    %v447 = vld [vmem:[#allocation6 + $0x108] sm:$0xff]
    %v448 = vld [vmem:[#allocation6 + $0x110] sm:$0xff]
    %v449 = vld [vmem:[#allocation6 + $0x118] sm:$0xff]
    %v450 = vld [vmem:[#allocation6 + $0x120] sm:$0xff]
    %v451 = vld [vmem:[#allocation6 + $0x128] sm:$0xff]
    %v452 = vld [vmem:[#allocation6 + $0x130] sm:$0xff]
    %v453 = vld [vmem:[#allocation6 + $0x138] sm:$0xff]
    %v454 = vld [vmem:[#allocation6 + $0x140] sm:$0xff]
    %v455 = vld [vmem:[#allocation6 + $0x148] sm:$0xff]
    %v456 = vld [vmem:[#allocation6 + $0x150] sm:$0xff]
    %v457 = vld [vmem:[#allocation6 + $0x158] sm:$0xff]
    %v458 = vld [vmem:[#allocation6 + $0x160] sm:$0xff]
    %v459 = vld [vmem:[#allocation6 + $0x168] sm:$0xff]
    %v460 = vld [vmem:[#allocation6 + $0x170] sm:$0xff]
    %v461 = vld [vmem:[#allocation6 + $0x178] sm:$0xff]
    %462 = vmatpush.msra.mxu0 %v459
    %463 = vmatpush.msra.mxu0 %v456
    %464 = vmatpush.msra.mxu0 %v453
    %465 = vmatpush.msra.mxu0 %v450
    %466 = vmatpush.msra.mxu0 %v447
    %467 = vmatpush.msra.mxu0 %v444
    %468 = vmatpush.msra.mxu0 %v441
    %469 = vmatpush.msra.mxu0 %v438
    %470 = vmatpush.msra.mxu0 %v435
    %471 = vmatpush.msra.mxu0 %v432
    %472 = vmatpush.msra.mxu0 %v429
    %473 = vmatpush.msra.mxu0 %v426
    %474 = vmatpush.msra.mxu0 %v423
    %475 = vmatpush.msra.mxu0 %v420
    %476 = vmatpush.msra.mxu0 %v417
    %477 = vmatpush.msra.mxu0 %v414
    %478 = vmatmul.f32.gmra.mxu0 %v402
    %v479 = vpop.f32.mrf.mxu0
    %v480 = vadd.f32 0.0, %v479
    %481 = vdwg.mxu0
    %482 = vmatpush.msra.mxu0 %v460
    %483 = vmatpush.msra.mxu0 %v457
    %484 = vmatpush.msra.mxu0 %v454
    %485 = vmatpush.msra.mxu0 %v451
    %486 = vmatpush.msra.mxu0 %v448
    %487 = vmatpush.msra.mxu0 %v445
    %488 = vmatpush.msra.mxu0 %v442
    %489 = vmatpush.msra.mxu0 %v439
    %490 = vmatpush.msra.mxu0 %v436
    %491 = vmatpush.msra.mxu0 %v433
    %492 = vmatpush.msra.mxu0 %v430
    %493 = vmatpush.msra.mxu0 %v427
    %494 = vmatpush.msra.mxu0 %v424
    %495 = vmatpush.msra.mxu0 %v421
    %496 = vmatpush.msra.mxu0 %v418
    %497 = vmatpush.msra.mxu0 %v415
    %498 = vmatmul.f32.gmra.mxu0 %v402
    %v499 = vpop.f32.mrf.mxu0
    %v500 = vadd.f32 0.0, %v499
    %501 = vdwg.mxu0
    %502 = vmatpush.msra.mxu0 %v461
    %503 = vmatpush.msra.mxu0 %v458
    %504 = vmatpush.msra.mxu0 %v455
    %505 = vmatpush.msra.mxu0 %v452
    %506 = vmatpush.msra.mxu0 %v449
    %507 = vmatpush.msra.mxu0 %v446
    %508 = vmatpush.msra.mxu0 %v443
    %509 = vmatpush.msra.mxu0 %v440
    %510 = vmatpush.msra.mxu0 %v437
    %511 = vmatpush.msra.mxu0 %v434
    %512 = vmatpush.msra.mxu0 %v431
    %513 = vmatpush.msra.mxu0 %v428
    %514 = vmatpush.msra.mxu0 %v425
    %515 = vmatpush.msra.mxu0 %v422
    %516 = vmatpush.msra.mxu0 %v419
    %517 = vmatpush.msra.mxu0 %v416
    %518 = vmatmul.f32.gmra.mxu0 %v402
    %v519 = vpop.f32.mrf.mxu0
    %v520 = vadd.f32 0.0, %v519
    %521 = vdwg.mxu0
    %v522 = vadd.f32 %v413, %v480
    %v523 = vxor.u32 %v522, 2147483648
    %v524 = vmul.f32 %v523, 1.442695
    %v525 = vpow.pop %v524
    %v526 = vadd.f32 %v525, 1.0
    %v527 = vrcp.pop %v526
    %v528 = vmul.f32 %v526, %v527
    %v529 = vsub.f32 1.0, %v528
    %v530 = vmul.f32 %v527, %v529
    %v531 = vadd.f32 %v527, %v530
    %vm532 = vweird.f32 %v526
    %vm533 = vweird.f32 %v527
    %vm534 = vmor %vm532, %vm533
    %v535 = vsel %vm534, %v527, %v531
    %v536 = vand.u32 2147483647, %v526
    %vm537 = vcmp.eq.f32.partialorder %v536, 8.507059e+37
    %v538 = vand.u32 %v526, 2147483648
    %v539 = vor.u32 1.1754944e-38, %v538
    %v540 = vsel %vm537, %v539, %v535
    %v541 = vmul.f32 1.0, %v540
    %v543 = vrot.slane %v413, 1
    %v545 = vadd.f32 %v543, %v500
    %v546 = vxor.u32 %v545, 2147483648
    %v547 = vmul.f32 %v546, 1.442695
    %v548 = vpow.pop %v547
    %v549 = vadd.f32 %v548, 1.0
    %v550 = vrcp.pop %v549
    %v551 = vmul.f32 %v549, %v550
    %v552 = vsub.f32 1.0, %v551
    %v553 = vmul.f32 %v550, %v552
    %v554 = vadd.f32 %v550, %v553
    %vm555 = vweird.f32 %v549
    %vm556 = vweird.f32 %v550
    %vm557 = vmor %vm555, %vm556
    %v558 = vsel %vm557, %v550, %v554
    %v559 = vand.u32 2147483647, %v549
    %vm560 = vcmp.eq.f32.partialorder %v559, 8.507059e+37
    %v561 = vand.u32 %v549, 2147483648
    %v562 = vor.u32 1.1754944e-38, %v561
    %v563 = vsel %vm560, %v562, %v558
    %v564 = vmul.f32 1.0, %v563
    %v565 = vadd.f32 %v520, %v58
    %v566 = vmul.f32 %v541, %v565
    %v567 = vrot.slane %v413, 2
    %v569 = vadd.f32 %v567, %v566
    %v570 = vtanh.pop %v569
    %v571 = vsub.f32 1.0, %v564
    %v572 = vmul.f32 %v571, %v570
    %v573 = vmul.f32 %v564, %v402
    %v574 = vadd.f32 %v572, %v573
    %575 = vst [vmem:[%s5 + $0x2] sm:$0x1] %v574
    %s576 = sld [smem:[#allocation3 + $0x3]]
    %s577 = sshra.s32 %s576, 3
    %s578 = sand.u32 %s576, 7
    %s579 = sshra.s32 %s576, 3
    %s580 = sand.u32 %s576, 7
    %s581 = smul.u32 %s577, 3
    %s582 = smul.u32 %s581, 8
    %s583 = sadd.s32 %s582, %s580
    %s584 = scalar_lea.vmem [#allocation4], %s583
    %v585 = vld [vmem:[%s584] ss:$8 sm:$0x7]
    %v586 = vld [vmem:[#allocation6] sm:$0xff]
    %v587 = vld [vmem:[#allocation6 + $0x8] sm:$0xff]
    %v588 = vld [vmem:[#allocation6 + $0x10] sm:$0xff]
    %v589 = vld [vmem:[#allocation6 + $0x18] sm:$0xff]
    %v590 = vld [vmem:[#allocation6 + $0x20] sm:$0xff]
    %v591 = vld [vmem:[#allocation6 + $0x28] sm:$0xff]
    %v592 = vld [vmem:[#allocation6 + $0x30] sm:$0xff]
    %v593 = vld [vmem:[#allocation6 + $0x38] sm:$0xff]
    %v594 = vld [vmem:[#allocation6 + $0x40] sm:$0xff]
    %v595 = vld [vmem:[#allocation6 + $0x48] sm:$0xff]
    %v596 = vld [vmem:[#allocation6 + $0x50] sm:$0xff]
    %v597 = vld [vmem:[#allocation6 + $0x58] sm:$0xff]
    %v598 = vld [vmem:[#allocation6 + $0x60] sm:$0xff]
    %v599 = vld [vmem:[#allocation6 + $0x68] sm:$0xff]
    %v600 = vld [vmem:[#allocation6 + $0x70] sm:$0xff]
    %v601 = vld [vmem:[#allocation6 + $0x78] sm:$0xff]
    %v602 = vld [vmem:[#allocation6 + $0x80] sm:$0xff]
    %v603 = vld [vmem:[#allocation6 + $0x88] sm:$0xff]
    %v604 = vld [vmem:[#allocation6 + $0x90] sm:$0xff]
    %v605 = vld [vmem:[#allocation6 + $0x98] sm:$0xff]
    %v606 = vld [vmem:[#allocation6 + $0xa0] sm:$0xff]
    %v607 = vld [vmem:[#allocation6 + $0xa8] sm:$0xff]
    %v608 = vld [vmem:[#allocation6 + $0xb0] sm:$0xff]
    %v609 = vld [vmem:[#allocation6 + $0xb8] sm:$0xff]
    %v610 = vld [vmem:[#allocation6 + $0xc0] sm:$0xff]
    %v611 = vld [vmem:[#allocation6 + $0xc8] sm:$0xff]
    %v612 = vld [vmem:[#allocation6 + $0xd0] sm:$0xff]
    %v613 = vld [vmem:[#allocation6 + $0xd8] sm:$0xff]
    %v614 = vld [vmem:[#allocation6 + $0xe0] sm:$0xff]
    %v615 = vld [vmem:[#allocation6 + $0xe8] sm:$0xff]
    %v616 = vld [vmem:[#allocation6 + $0xf0] sm:$0xff]
    %v617 = vld [vmem:[#allocation6 + $0xf8] sm:$0xff]
    %v618 = vld [vmem:[#allocation6 + $0x100] sm:$0xff]
    %v619 = vld [vmem:[#allocation6 + $0x108] sm:$0xff]
    %v620 = vld [vmem:[#allocation6 + $0x110] sm:$0xff]
    %v621 = vld [vmem:[#allocation6 + $0x118] sm:$0xff]
    %v622 = vld [vmem:[#allocation6 + $0x120] sm:$0xff]
    %v623 = vld [vmem:[#allocation6 + $0x128] sm:$0xff]
    %v624 = vld [vmem:[#allocation6 + $0x130] sm:$0xff]
    %v625 = vld [vmem:[#allocation6 + $0x138] sm:$0xff]
    %v626 = vld [vmem:[#allocation6 + $0x140] sm:$0xff]
    %v627 = vld [vmem:[#allocation6 + $0x148] sm:$0xff]
    %v628 = vld [vmem:[#allocation6 + $0x150] sm:$0xff]
    %v629 = vld [vmem:[#allocation6 + $0x158] sm:$0xff]
    %v630 = vld [vmem:[#allocation6 + $0x160] sm:$0xff]
    %v631 = vld [vmem:[#allocation6 + $0x168] sm:$0xff]
    %v632 = vld [vmem:[#allocation6 + $0x170] sm:$0xff]
    %v633 = vld [vmem:[#allocation6 + $0x178] sm:$0xff]
    %634 = vmatpush.msra.mxu0 %v631
    %635 = vmatpush.msra.mxu0 %v628
    %636 = vmatpush.msra.mxu0 %v625
    %637 = vmatpush.msra.mxu0 %v622
    %638 = vmatpush.msra.mxu0 %v619
    %639 = vmatpush.msra.mxu0 %v616
    %640 = vmatpush.msra.mxu0 %v613
    %641 = vmatpush.msra.mxu0 %v610
    %642 = vmatpush.msra.mxu0 %v607
    %643 = vmatpush.msra.mxu0 %v604
    %644 = vmatpush.msra.mxu0 %v601
    %645 = vmatpush.msra.mxu0 %v598
    %646 = vmatpush.msra.mxu0 %v595
    %647 = vmatpush.msra.mxu0 %v592
    %648 = vmatpush.msra.mxu0 %v589
    %649 = vmatpush.msra.mxu0 %v586
    %650 = vmatmul.f32.gmra.mxu0 %v574
    %v651 = vpop.f32.mrf.mxu0
    %v652 = vadd.f32 0.0, %v651
    %653 = vdwg.mxu0
    %654 = vmatpush.msra.mxu0 %v632
    %655 = vmatpush.msra.mxu0 %v629
    %656 = vmatpush.msra.mxu0 %v626
    %657 = vmatpush.msra.mxu0 %v623
    %658 = vmatpush.msra.mxu0 %v620
    %659 = vmatpush.msra.mxu0 %v617
    %660 = vmatpush.msra.mxu0 %v614
    %661 = vmatpush.msra.mxu0 %v611
    %662 = vmatpush.msra.mxu0 %v608
    %663 = vmatpush.msra.mxu0 %v605
    %664 = vmatpush.msra.mxu0 %v602
    %665 = vmatpush.msra.mxu0 %v599
    %666 = vmatpush.msra.mxu0 %v596
    %667 = vmatpush.msra.mxu0 %v593
    %668 = vmatpush.msra.mxu0 %v590
    %669 = vmatpush.msra.mxu0 %v587
    %670 = vmatmul.f32.gmra.mxu0 %v574
    %v671 = vpop.f32.mrf.mxu0
    %v672 = vadd.f32 0.0, %v671
    %673 = vdwg.mxu0
    %674 = vmatpush.msra.mxu0 %v633
    %675 = vmatpush.msra.mxu0 %v630
    %676 = vmatpush.msra.mxu0 %v627
    %677 = vmatpush.msra.mxu0 %v624
    %678 = vmatpush.msra.mxu0 %v621
    %679 = vmatpush.msra.mxu0 %v618
    %680 = vmatpush.msra.mxu0 %v615
    %681 = vmatpush.msra.mxu0 %v612
    %682 = vmatpush.msra.mxu0 %v609
    %683 = vmatpush.msra.mxu0 %v606
    %684 = vmatpush.msra.mxu0 %v603
    %685 = vmatpush.msra.mxu0 %v600
    %686 = vmatpush.msra.mxu0 %v597
    %687 = vmatpush.msra.mxu0 %v594
    %688 = vmatpush.msra.mxu0 %v591
    %689 = vmatpush.msra.mxu0 %v588
    %690 = vmatmul.f32.gmra.mxu0 %v574
    %v691 = vpop.f32.mrf.mxu0
    %v692 = vadd.f32 0.0, %v691
    %693 = vdwg.mxu0
    %v694 = vadd.f32 %v585, %v652
    %v695 = vxor.u32 %v694, 2147483648
    %v696 = vmul.f32 %v695, 1.442695
    %v697 = vpow.pop %v696
    %v698 = vadd.f32 %v697, 1.0
    %v699 = vrcp.pop %v698
    %v700 = vmul.f32 %v698, %v699
    %v701 = vsub.f32 1.0, %v700
    %v702 = vmul.f32 %v699, %v701
    %v703 = vadd.f32 %v699, %v702
    %vm704 = vweird.f32 %v698
    %vm705 = vweird.f32 %v699
    %vm706 = vmor %vm704, %vm705
    %v707 = vsel %vm706, %v699, %v703
    %v708 = vand.u32 2147483647, %v698
    %vm709 = vcmp.eq.f32.partialorder %v708, 8.507059e+37
    %v710 = vand.u32 %v698, 2147483648
    %v711 = vor.u32 1.1754944e-38, %v710
    %v712 = vsel %vm709, %v711, %v707
    %v713 = vmul.f32 1.0, %v712
    %v715 = vrot.slane %v585, 1
    %v717 = vadd.f32 %v715, %v672
    %v718 = vxor.u32 %v717, 2147483648
    %v719 = vmul.f32 %v718, 1.442695
    %v720 = vpow.pop %v719
    %v721 = vadd.f32 %v720, 1.0
    %v722 = vrcp.pop %v721
    %v723 = vmul.f32 %v721, %v722
    %v724 = vsub.f32 1.0, %v723
    %v725 = vmul.f32 %v722, %v724
    %v726 = vadd.f32 %v722, %v725
    %vm727 = vweird.f32 %v721
    %vm728 = vweird.f32 %v722
    %vm729 = vmor %vm727, %vm728
    %v730 = vsel %vm729, %v722, %v726
    %v731 = vand.u32 2147483647, %v721
    %vm732 = vcmp.eq.f32.partialorder %v731, 8.507059e+37
    %v733 = vand.u32 %v721, 2147483648
    %v734 = vor.u32 1.1754944e-38, %v733
    %v735 = vsel %vm732, %v734, %v730
    %v736 = vmul.f32 1.0, %v735
    %v737 = vadd.f32 %v692, %v58
    %v738 = vmul.f32 %v713, %v737
    %v739 = vrot.slane %v585, 2
    %v741 = vadd.f32 %v739, %v738
    %v742 = vtanh.pop %v741
    %v743 = vsub.f32 1.0, %v736
    %v744 = vmul.f32 %v743, %v742
    %v745 = vmul.f32 %v736, %v574
    %v746 = vadd.f32 %v744, %v745
    %747 = vst [vmem:[%s5 + $0x3] sm:$0x1] %v746
    %s748 = sld [smem:[#allocation3 + $0x4]]
    %s749 = sshra.s32 %s748, 3
    %s750 = sand.u32 %s748, 7
    %s751 = sshra.s32 %s748, 3
    %s752 = sand.u32 %s748, 7
    %s753 = smul.u32 %s749, 3
    %s754 = smul.u32 %s753, 8
    %s755 = sadd.s32 %s754, %s752
    %s756 = scalar_lea.vmem [#allocation4], %s755
    %v757 = vld [vmem:[%s756] ss:$8 sm:$0x7]
    %v758 = vld [vmem:[#allocation6] sm:$0xff]
    %v759 = vld [vmem:[#allocation6 + $0x8] sm:$0xff]
    %v760 = vld [vmem:[#allocation6 + $0x10] sm:$0xff]
    %v761 = vld [vmem:[#allocation6 + $0x18] sm:$0xff]
    %v762 = vld [vmem:[#allocation6 + $0x20] sm:$0xff]
    %v763 = vld [vmem:[#allocation6 + $0x28] sm:$0xff]
    %v764 = vld [vmem:[#allocation6 + $0x30] sm:$0xff]
    %v765 = vld [vmem:[#allocation6 + $0x38] sm:$0xff]
    %v766 = vld [vmem:[#allocation6 + $0x40] sm:$0xff]
    %v767 = vld [vmem:[#allocation6 + $0x48] sm:$0xff]
    %v768 = vld [vmem:[#allocation6 + $0x50] sm:$0xff]
    %v769 = vld [vmem:[#allocation6 + $0x58] sm:$0xff]
    %v770 = vld [vmem:[#allocation6 + $0x60] sm:$0xff]
    %v771 = vld [vmem:[#allocation6 + $0x68] sm:$0xff]
    %v772 = vld [vmem:[#allocation6 + $0x70] sm:$0xff]
    %v773 = vld [vmem:[#allocation6 + $0x78] sm:$0xff]
    %v774 = vld [vmem:[#allocation6 + $0x80] sm:$0xff]
    %v775 = vld [vmem:[#allocation6 + $0x88] sm:$0xff]
    %v776 = vld [vmem:[#allocation6 + $0x90] sm:$0xff]
    %v777 = vld [vmem:[#allocation6 + $0x98] sm:$0xff]
    %v778 = vld [vmem:[#allocation6 + $0xa0] sm:$0xff]
    %v779 = vld [vmem:[#allocation6 + $0xa8] sm:$0xff]
    %v780 = vld [vmem:[#allocation6 + $0xb0] sm:$0xff]
    %v781 = vld [vmem:[#allocation6 + $0xb8] sm:$0xff]
    %v782 = vld [vmem:[#allocation6 + $0xc0] sm:$0xff]
    %v783 = vld [vmem:[#allocation6 + $0xc8] sm:$0xff]
    %v784 = vld [vmem:[#allocation6 + $0xd0] sm:$0xff]
    %v785 = vld [vmem:[#allocation6 + $0xd8] sm:$0xff]
    %v786 = vld [vmem:[#allocation6 + $0xe0] sm:$0xff]
    %v787 = vld [vmem:[#allocation6 + $0xe8] sm:$0xff]
    %v788 = vld [vmem:[#allocation6 + $0xf0] sm:$0xff]
    %v789 = vld [vmem:[#allocation6 + $0xf8] sm:$0xff]
    %v790 = vld [vmem:[#allocation6 + $0x100] sm:$0xff]
    %v791 = vld [vmem:[#allocation6 + $0x108] sm:$0xff]
    %v792 = vld [vmem:[#allocation6 + $0x110] sm:$0xff]
    %v793 = vld [vmem:[#allocation6 + $0x118] sm:$0xff]
    %v794 = vld [vmem:[#allocation6 + $0x120] sm:$0xff]
    %v795 = vld [vmem:[#allocation6 + $0x128] sm:$0xff]
    %v796 = vld [vmem:[#allocation6 + $0x130] sm:$0xff]
    %v797 = vld [vmem:[#allocation6 + $0x138] sm:$0xff]
    %v798 = vld [vmem:[#allocation6 + $0x140] sm:$0xff]
    %v799 = vld [vmem:[#allocation6 + $0x148] sm:$0xff]
    %v800 = vld [vmem:[#allocation6 + $0x150] sm:$0xff]
    %v801 = vld [vmem:[#allocation6 + $0x158] sm:$0xff]
    %v802 = vld [vmem:[#allocation6 + $0x160] sm:$0xff]
    %v803 = vld [vmem:[#allocation6 + $0x168] sm:$0xff]
    %v804 = vld [vmem:[#allocation6 + $0x170] sm:$0xff]
    %v805 = vld [vmem:[#allocation6 + $0x178] sm:$0xff]
    %806 = vmatpush.msra.mxu0 %v803
    %807 = vmatpush.msra.mxu0 %v800
    %808 = vmatpush.msra.mxu0 %v797
    %809 = vmatpush.msra.mxu0 %v794
    %810 = vmatpush.msra.mxu0 %v791
    %811 = vmatpush.msra.mxu0 %v788
    %812 = vmatpush.msra.mxu0 %v785
    %813 = vmatpush.msra.mxu0 %v782
    %814 = vmatpush.msra.mxu0 %v779
    %815 = vmatpush.msra.mxu0 %v776
    %816 = vmatpush.msra.mxu0 %v773
    %817 = vmatpush.msra.mxu0 %v770
    %818 = vmatpush.msra.mxu0 %v767
    %819 = vmatpush.msra.mxu0 %v764
    %820 = vmatpush.msra.mxu0 %v761
    %821 = vmatpush.msra.mxu0 %v758
    %822 = vmatmul.f32.gmra.mxu0 %v746
    %v823 = vpop.f32.mrf.mxu0
    %v824 = vadd.f32 0.0, %v823
    %825 = vdwg.mxu0
    %826 = vmatpush.msra.mxu0 %v804
    %827 = vmatpush.msra.mxu0 %v801
    %828 = vmatpush.msra.mxu0 %v798
    %829 = vmatpush.msra.mxu0 %v795
    %830 = vmatpush.msra.mxu0 %v792
    %831 = vmatpush.msra.mxu0 %v789
    %832 = vmatpush.msra.mxu0 %v786
    %833 = vmatpush.msra.mxu0 %v783
    %834 = vmatpush.msra.mxu0 %v780
    %835 = vmatpush.msra.mxu0 %v777
    %836 = vmatpush.msra.mxu0 %v774
    %837 = vmatpush.msra.mxu0 %v771
    %838 = vmatpush.msra.mxu0 %v768
    %839 = vmatpush.msra.mxu0 %v765
    %840 = vmatpush.msra.mxu0 %v762
    %841 = vmatpush.msra.mxu0 %v759
    %842 = vmatmul.f32.gmra.mxu0 %v746
    %v843 = vpop.f32.mrf.mxu0
    %v844 = vadd.f32 0.0, %v843
    %845 = vdwg.mxu0
    %846 = vmatpush.msra.mxu0 %v805
    %847 = vmatpush.msra.mxu0 %v802
    %848 = vmatpush.msra.mxu0 %v799
    %849 = vmatpush.msra.mxu0 %v796
    %850 = vmatpush.msra.mxu0 %v793
    %851 = vmatpush.msra.mxu0 %v790
    %852 = vmatpush.msra.mxu0 %v787
    %853 = vmatpush.msra.mxu0 %v784
    %854 = vmatpush.msra.mxu0 %v781
    %855 = vmatpush.msra.mxu0 %v778
    %856 = vmatpush.msra.mxu0 %v775
    %857 = vmatpush.msra.mxu0 %v772
    %858 = vmatpush.msra.mxu0 %v769
    %859 = vmatpush.msra.mxu0 %v766
    %860 = vmatpush.msra.mxu0 %v763
    %861 = vmatpush.msra.mxu0 %v760
    %862 = vmatmul.f32.gmra.mxu0 %v746
    %v863 = vpop.f32.mrf.mxu0
    %v864 = vadd.f32 0.0, %v863
    %865 = vdwg.mxu0
    %v866 = vadd.f32 %v757, %v824
    %v867 = vxor.u32 %v866, 2147483648
    %v868 = vmul.f32 %v867, 1.442695
    %v869 = vpow.pop %v868
    %v870 = vadd.f32 %v869, 1.0
    %v871 = vrcp.pop %v870
    %v872 = vmul.f32 %v870, %v871
    %v873 = vsub.f32 1.0, %v872
    %v874 = vmul.f32 %v871, %v873
    %v875 = vadd.f32 %v871, %v874
    %vm876 = vweird.f32 %v870
    %vm877 = vweird.f32 %v871
    %vm878 = vmor %vm876, %vm877
    %v879 = vsel %vm878, %v871, %v875
    %v880 = vand.u32 2147483647, %v870
    %vm881 = vcmp.eq.f32.partialorder %v880, 8.507059e+37
    %v882 = vand.u32 %v870, 2147483648
    %v883 = vor.u32 1.1754944e-38, %v882
    %v884 = vsel %vm881, %v883, %v879
    %v885 = vmul.f32 1.0, %v884
    %v887 = vrot.slane %v757, 1
    %v889 = vadd.f32 %v887, %v844
    %v890 = vxor.u32 %v889, 2147483648
    %v891 = vmul.f32 %v890, 1.442695
    %v892 = vpow.pop %v891
    %v893 = vadd.f32 %v892, 1.0
    %v894 = vrcp.pop %v893
    %v895 = vmul.f32 %v893, %v894
    %v896 = vsub.f32 1.0, %v895
    %v897 = vmul.f32 %v894, %v896
    %v898 = vadd.f32 %v894, %v897
    %vm899 = vweird.f32 %v893
    %vm900 = vweird.f32 %v894
    %vm901 = vmor %vm899, %vm900
    %v902 = vsel %vm901, %v894, %v898
    %v903 = vand.u32 2147483647, %v893
    %vm904 = vcmp.eq.f32.partialorder %v903, 8.507059e+37
    %v905 = vand.u32 %v893, 2147483648
    %v906 = vor.u32 1.1754944e-38, %v905
    %v907 = vsel %vm904, %v906, %v902
    %v908 = vmul.f32 1.0, %v907
    %v909 = vadd.f32 %v864, %v58
    %v910 = vmul.f32 %v885, %v909
    %v911 = vrot.slane %v757, 2
    %v913 = vadd.f32 %v911, %v910
    %v914 = vtanh.pop %v913
    %v915 = vsub.f32 1.0, %v908
    %v916 = vmul.f32 %v915, %v914
    %v917 = vmul.f32 %v908, %v746
    %v918 = vadd.f32 %v916, %v917
    %919 = vst [vmem:[%s5 + $0x4] sm:$0x1] %v918
    %s920 = sld [smem:[#allocation3 + $0x5]]
    %s921 = sshra.s32 %s920, 3
    %s922 = sand.u32 %s920, 7
    %s923 = sshra.s32 %s920, 3
    %s924 = sand.u32 %s920, 7
    %s925 = smul.u32 %s921, 3
    %s926 = smul.u32 %s925, 8
    %s927 = sadd.s32 %s926, %s924
    %s928 = scalar_lea.vmem [#allocation4], %s927
    %v929 = vld [vmem:[%s928] ss:$8 sm:$0x7]
    %v930 = vld [vmem:[#allocation6] sm:$0xff]
    %v931 = vld [vmem:[#allocation6 + $0x8] sm:$0xff]
    %v932 = vld [vmem:[#allocation6 + $0x10] sm:$0xff]
    %v933 = vld [vmem:[#allocation6 + $0x18] sm:$0xff]
    %v934 = vld [vmem:[#allocation6 + $0x20] sm:$0xff]
    %v935 = vld [vmem:[#allocation6 + $0x28] sm:$0xff]
    %v936 = vld [vmem:[#allocation6 + $0x30] sm:$0xff]
    %v937 = vld [vmem:[#allocation6 + $0x38] sm:$0xff]
    %v938 = vld [vmem:[#allocation6 + $0x40] sm:$0xff]
    %v939 = vld [vmem:[#allocation6 + $0x48] sm:$0xff]
    %v940 = vld [vmem:[#allocation6 + $0x50] sm:$0xff]
    %v941 = vld [vmem:[#allocation6 + $0x58] sm:$0xff]
    %v942 = vld [vmem:[#allocation6 + $0x60] sm:$0xff]
    %v943 = vld [vmem:[#allocation6 + $0x68] sm:$0xff]
    %v944 = vld [vmem:[#allocation6 + $0x70] sm:$0xff]
    %v945 = vld [vmem:[#allocation6 + $0x78] sm:$0xff]
    %v946 = vld [vmem:[#allocation6 + $0x80] sm:$0xff]
    %v947 = vld [vmem:[#allocation6 + $0x88] sm:$0xff]
    %v948 = vld [vmem:[#allocation6 + $0x90] sm:$0xff]
    %v949 = vld [vmem:[#allocation6 + $0x98] sm:$0xff]
    %v950 = vld [vmem:[#allocation6 + $0xa0] sm:$0xff]
    %v951 = vld [vmem:[#allocation6 + $0xa8] sm:$0xff]
    %v952 = vld [vmem:[#allocation6 + $0xb0] sm:$0xff]
    %v953 = vld [vmem:[#allocation6 + $0xb8] sm:$0xff]
    %v954 = vld [vmem:[#allocation6 + $0xc0] sm:$0xff]
    %v955 = vld [vmem:[#allocation6 + $0xc8] sm:$0xff]
    %v956 = vld [vmem:[#allocation6 + $0xd0] sm:$0xff]
    %v957 = vld [vmem:[#allocation6 + $0xd8] sm:$0xff]
    %v958 = vld [vmem:[#allocation6 + $0xe0] sm:$0xff]
    %v959 = vld [vmem:[#allocation6 + $0xe8] sm:$0xff]
    %v960 = vld [vmem:[#allocation6 + $0xf0] sm:$0xff]
    %v961 = vld [vmem:[#allocation6 + $0xf8] sm:$0xff]
    %v962 = vld [vmem:[#allocation6 + $0x100] sm:$0xff]
    %v963 = vld [vmem:[#allocation6 + $0x108] sm:$0xff]
    %v964 = vld [vmem:[#allocation6 + $0x110] sm:$0xff]
    %v965 = vld [vmem:[#allocation6 + $0x118] sm:$0xff]
    %v966 = vld [vmem:[#allocation6 + $0x120] sm:$0xff]
    %v967 = vld [vmem:[#allocation6 + $0x128] sm:$0xff]
    %v968 = vld [vmem:[#allocation6 + $0x130] sm:$0xff]
    %v969 = vld [vmem:[#allocation6 + $0x138] sm:$0xff]
    %v970 = vld [vmem:[#allocation6 + $0x140] sm:$0xff]
    %v971 = vld [vmem:[#allocation6 + $0x148] sm:$0xff]
    %v972 = vld [vmem:[#allocation6 + $0x150] sm:$0xff]
    %v973 = vld [vmem:[#allocation6 + $0x158] sm:$0xff]
    %v974 = vld [vmem:[#allocation6 + $0x160] sm:$0xff]
    %v975 = vld [vmem:[#allocation6 + $0x168] sm:$0xff]
    %v976 = vld [vmem:[#allocation6 + $0x170] sm:$0xff]
    %v977 = vld [vmem:[#allocation6 + $0x178] sm:$0xff]
    %978 = vmatpush.msra.mxu0 %v975
    %979 = vmatpush.msra.mxu0 %v972
    %980 = vmatpush.msra.mxu0 %v969
    %981 = vmatpush.msra.mxu0 %v966
    %982 = vmatpush.msra.mxu0 %v963
    %983 = vmatpush.msra.mxu0 %v960
    %984 = vmatpush.msra.mxu0 %v957
    %985 = vmatpush.msra.mxu0 %v954
    %986 = vmatpush.msra.mxu0 %v951
    %987 = vmatpush.msra.mxu0 %v948
    %988 = vmatpush.msra.mxu0 %v945
    %989 = vmatpush.msra.mxu0 %v942
    %990 = vmatpush.msra.mxu0 %v939
    %991 = vmatpush.msra.mxu0 %v936
    %992 = vmatpush.msra.mxu0 %v933
    %993 = vmatpush.msra.mxu0 %v930
    %994 = vmatmul.f32.gmra.mxu0 %v918
    %v995 = vpop.f32.mrf.mxu0
    %v996 = vadd.f32 0.0, %v995
    %997 = vdwg.mxu0
    %998 = vmatpush.msra.mxu0 %v976
    %999 = vmatpush.msra.mxu0 %v973
    %1000 = vmatpush.msra.mxu0 %v970
    %1001 = vmatpush.msra.mxu0 %v967
    %1002 = vmatpush.msra.mxu0 %v964
    %1003 = vmatpush.msra.mxu0 %v961
    %1004 = vmatpush.msra.mxu0 %v958
    %1005 = vmatpush.msra.mxu0 %v955
    %1006 = vmatpush.msra.mxu0 %v952
    %1007 = vmatpush.msra.mxu0 %v949
    %1008 = vmatpush.msra.mxu0 %v946
    %1009 = vmatpush.msra.mxu0 %v943
    %1010 = vmatpush.msra.mxu0 %v940
    %1011 = vmatpush.msra.mxu0 %v937
    %1012 = vmatpush.msra.mxu0 %v934
    %1013 = vmatpush.msra.mxu0 %v931
    %1014 = vmatmul.f32.gmra.mxu0 %v918
    %v1015 = vpop.f32.mrf.mxu0
    %v1016 = vadd.f32 0.0, %v1015
    %1017 = vdwg.mxu0
    %1018 = vmatpush.msra.mxu0 %v977
    %1019 = vmatpush.msra.mxu0 %v974
    %1020 = vmatpush.msra.mxu0 %v971
    %1021 = vmatpush.msra.mxu0 %v968
    %1022 = vmatpush.msra.mxu0 %v965
    %1023 = vmatpush.msra.mxu0 %v962
    %1024 = vmatpush.msra.mxu0 %v959
    %1025 = vmatpush.msra.mxu0 %v956
    %1026 = vmatpush.msra.mxu0 %v953
    %1027 = vmatpush.msra.mxu0 %v950
    %1028 = vmatpush.msra.mxu0 %v947
    %1029 = vmatpush.msra.mxu0 %v944
    %1030 = vmatpush.msra.mxu0 %v941
    %1031 = vmatpush.msra.mxu0 %v938
    %1032 = vmatpush.msra.mxu0 %v935
    %1033 = vmatpush.msra.mxu0 %v932
    %1034 = vmatmul.f32.gmra.mxu0 %v918
    %v1035 = vpop.f32.mrf.mxu0
    %v1036 = vadd.f32 0.0, %v1035
    %1037 = vdwg.mxu0
    %v1038 = vadd.f32 %v929, %v996
    %v1039 = vxor.u32 %v1038, 2147483648
    %v1040 = vmul.f32 %v1039, 1.442695
    %v1041 = vpow.pop %v1040
    %v1042 = vadd.f32 %v1041, 1.0
    %v1043 = vrcp.pop %v1042
    %v1044 = vmul.f32 %v1042, %v1043
    %v1045 = vsub.f32 1.0, %v1044
    %v1046 = vmul.f32 %v1043, %v1045
    %v1047 = vadd.f32 %v1043, %v1046
    %vm1048 = vweird.f32 %v1042
    %vm1049 = vweird.f32 %v1043
    %vm1050 = vmor %vm1048, %vm1049
    %v1051 = vsel %vm1050, %v1043, %v1047
    %v1052 = vand.u32 2147483647, %v1042
    %vm1053 = vcmp.eq.f32.partialorder %v1052, 8.507059e+37
    %v1054 = vand.u32 %v1042, 2147483648
    %v1055 = vor.u32 1.1754944e-38, %v1054
    %v1056 = vsel %vm1053, %v1055, %v1051
    %v1057 = vmul.f32 1.0, %v1056
    %v1059 = vrot.slane %v929, 1
    %v1061 = vadd.f32 %v1059, %v1016
    %v1062 = vxor.u32 %v1061, 2147483648
    %v1063 = vmul.f32 %v1062, 1.442695
    %v1064 = vpow.pop %v1063
    %v1065 = vadd.f32 %v1064, 1.0
    %v1066 = vrcp.pop %v1065
    %v1067 = vmul.f32 %v1065, %v1066
    %v1068 = vsub.f32 1.0, %v1067
    %v1069 = vmul.f32 %v1066, %v1068
    %v1070 = vadd.f32 %v1066, %v1069
    %vm1071 = vweird.f32 %v1065
    %vm1072 = vweird.f32 %v1066
    %vm1073 = vmor %vm1071, %vm1072
    %v1074 = vsel %vm1073, %v1066, %v1070
    %v1075 = vand.u32 2147483647, %v1065
    %vm1076 = vcmp.eq.f32.partialorder %v1075, 8.507059e+37
    %v1077 = vand.u32 %v1065, 2147483648
    %v1078 = vor.u32 1.1754944e-38, %v1077
    %v1079 = vsel %vm1076, %v1078, %v1074
    %v1080 = vmul.f32 1.0, %v1079
    %v1081 = vadd.f32 %v1036, %v58
    %v1082 = vmul.f32 %v1057, %v1081
    %v1083 = vrot.slane %v929, 2
    %v1085 = vadd.f32 %v1083, %v1082
    %v1086 = vtanh.pop %v1085
    %v1087 = vsub.f32 1.0, %v1080
    %v1088 = vmul.f32 %v1087, %v1086
    %v1089 = vmul.f32 %v1080, %v918
    %v1090 = vadd.f32 %v1088, %v1089
    %1091 = vst [vmem:[%s5 + $0x5] sm:$0x1] %v1090
    %s1092 = sld [smem:[#allocation3 + $0x6]]
    %s1093 = sshra.s32 %s1092, 3
    %s1094 = sand.u32 %s1092, 7
    %s1095 = sshra.s32 %s1092, 3
    %s1096 = sand.u32 %s1092, 7
    %s1097 = smul.u32 %s1093, 3
    %s1098 = smul.u32 %s1097, 8
    %s1099 = sadd.s32 %s1098, %s1096
    %s1100 = scalar_lea.vmem [#allocation4], %s1099
    %v1101 = vld [vmem:[%s1100] ss:$8 sm:$0x7]
    %v1102 = vld [vmem:[#allocation6] sm:$0xff]
    %v1103 = vld [vmem:[#allocation6 + $0x8] sm:$0xff]
    %v1104 = vld [vmem:[#allocation6 + $0x10] sm:$0xff]
    %v1105 = vld [vmem:[#allocation6 + $0x18] sm:$0xff]
    %v1106 = vld [vmem:[#allocation6 + $0x20] sm:$0xff]
    %v1107 = vld [vmem:[#allocation6 + $0x28] sm:$0xff]
    %v1108 = vld [vmem:[#allocation6 + $0x30] sm:$0xff]
    %v1109 = vld [vmem:[#allocation6 + $0x38] sm:$0xff]
    %v1110 = vld [vmem:[#allocation6 + $0x40] sm:$0xff]
    %v1111 = vld [vmem:[#allocation6 + $0x48] sm:$0xff]
    %v1112 = vld [vmem:[#allocation6 + $0x50] sm:$0xff]
    %v1113 = vld [vmem:[#allocation6 + $0x58] sm:$0xff]
    %v1114 = vld [vmem:[#allocation6 + $0x60] sm:$0xff]
    %v1115 = vld [vmem:[#allocation6 + $0x68] sm:$0xff]
    %v1116 = vld [vmem:[#allocation6 + $0x70] sm:$0xff]
    %v1117 = vld [vmem:[#allocation6 + $0x78] sm:$0xff]
    %v1118 = vld [vmem:[#allocation6 + $0x80] sm:$0xff]
    %v1119 = vld [vmem:[#allocation6 + $0x88] sm:$0xff]
    %v1120 = vld [vmem:[#allocation6 + $0x90] sm:$0xff]
    %v1121 = vld [vmem:[#allocation6 + $0x98] sm:$0xff]
    %v1122 = vld [vmem:[#allocation6 + $0xa0] sm:$0xff]
    %v1123 = vld [vmem:[#allocation6 + $0xa8] sm:$0xff]
    %v1124 = vld [vmem:[#allocation6 + $0xb0] sm:$0xff]
    %v1125 = vld [vmem:[#allocation6 + $0xb8] sm:$0xff]
    %v1126 = vld [vmem:[#allocation6 + $0xc0] sm:$0xff]
    %v1127 = vld [vmem:[#allocation6 + $0xc8] sm:$0xff]
    %v1128 = vld [vmem:[#allocation6 + $0xd0] sm:$0xff]
    %v1129 = vld [vmem:[#allocation6 + $0xd8] sm:$0xff]
    %v1130 = vld [vmem:[#allocation6 + $0xe0] sm:$0xff]
    %v1131 = vld [vmem:[#allocation6 + $0xe8] sm:$0xff]
    %v1132 = vld [vmem:[#allocation6 + $0xf0] sm:$0xff]
    %v1133 = vld [vmem:[#allocation6 + $0xf8] sm:$0xff]
    %v1134 = vld [vmem:[#allocation6 + $0x100] sm:$0xff]
    %v1135 = vld [vmem:[#allocation6 + $0x108] sm:$0xff]
    %v1136 = vld [vmem:[#allocation6 + $0x110] sm:$0xff]
    %v1137 = vld [vmem:[#allocation6 + $0x118] sm:$0xff]
    %v1138 = vld [vmem:[#allocation6 + $0x120] sm:$0xff]
    %v1139 = vld [vmem:[#allocation6 + $0x128] sm:$0xff]
    %v1140 = vld [vmem:[#allocation6 + $0x130] sm:$0xff]
    %v1141 = vld [vmem:[#allocation6 + $0x138] sm:$0xff]
    %v1142 = vld [vmem:[#allocation6 + $0x140] sm:$0xff]
    %v1143 = vld [vmem:[#allocation6 + $0x148] sm:$0xff]
    %v1144 = vld [vmem:[#allocation6 + $0x150] sm:$0xff]
    %v1145 = vld [vmem:[#allocation6 + $0x158] sm:$0xff]
    %v1146 = vld [vmem:[#allocation6 + $0x160] sm:$0xff]
    %v1147 = vld [vmem:[#allocation6 + $0x168] sm:$0xff]
    %v1148 = vld [vmem:[#allocation6 + $0x170] sm:$0xff]
    %v1149 = vld [vmem:[#allocation6 + $0x178] sm:$0xff]
    %1150 = vmatpush.msra.mxu0 %v1147
    %1151 = vmatpush.msra.mxu0 %v1144
    %1152 = vmatpush.msra.mxu0 %v1141
    %1153 = vmatpush.msra.mxu0 %v1138
    %1154 = vmatpush.msra.mxu0 %v1135
    %1155 = vmatpush.msra.mxu0 %v1132
    %1156 = vmatpush.msra.mxu0 %v1129
    %1157 = vmatpush.msra.mxu0 %v1126
    %1158 = vmatpush.msra.mxu0 %v1123
    %1159 = vmatpush.msra.mxu0 %v1120
    %1160 = vmatpush.msra.mxu0 %v1117
    %1161 = vmatpush.msra.mxu0 %v1114
    %1162 = vmatpush.msra.mxu0 %v1111
    %1163 = vmatpush.msra.mxu0 %v1108
    %1164 = vmatpush.msra.mxu0 %v1105
    %1165 = vmatpush.msra.mxu0 %v1102
    %1166 = vmatmul.f32.gmra.mxu0 %v1090
    %v1167 = vpop.f32.mrf.mxu0
    %v1168 = vadd.f32 0.0, %v1167
    %1169 = vdwg.mxu0
    %1170 = vmatpush.msra.mxu0 %v1148
    %1171 = vmatpush.msra.mxu0 %v1145
    %1172 = vmatpush.msra.mxu0 %v1142
    %1173 = vmatpush.msra.mxu0 %v1139
    %1174 = vmatpush.msra.mxu0 %v1136
    %1175 = vmatpush.msra.mxu0 %v1133
    %1176 = vmatpush.msra.mxu0 %v1130
    %1177 = vmatpush.msra.mxu0 %v1127
    %1178 = vmatpush.msra.mxu0 %v1124
    %1179 = vmatpush.msra.mxu0 %v1121
    %1180 = vmatpush.msra.mxu0 %v1118
    %1181 = vmatpush.msra.mxu0 %v1115
    %1182 = vmatpush.msra.mxu0 %v1112
    %1183 = vmatpush.msra.mxu0 %v1109
    %1184 = vmatpush.msra.mxu0 %v1106
    %1185 = vmatpush.msra.mxu0 %v1103
    %1186 = vmatmul.f32.gmra.mxu0 %v1090
    %v1187 = vpop.f32.mrf.mxu0
    %v1188 = vadd.f32 0.0, %v1187
    %1189 = vdwg.mxu0
    %1190 = vmatpush.msra.mxu0 %v1149
    %1191 = vmatpush.msra.mxu0 %v1146
    %1192 = vmatpush.msra.mxu0 %v1143
    %1193 = vmatpush.msra.mxu0 %v1140
    %1194 = vmatpush.msra.mxu0 %v1137
    %1195 = vmatpush.msra.mxu0 %v1134
    %1196 = vmatpush.msra.mxu0 %v1131
    %1197 = vmatpush.msra.mxu0 %v1128
    %1198 = vmatpush.msra.mxu0 %v1125
    %1199 = vmatpush.msra.mxu0 %v1122
    %1200 = vmatpush.msra.mxu0 %v1119
    %1201 = vmatpush.msra.mxu0 %v1116
    %1202 = vmatpush.msra.mxu0 %v1113
    %1203 = vmatpush.msra.mxu0 %v1110
    %1204 = vmatpush.msra.mxu0 %v1107
    %1205 = vmatpush.msra.mxu0 %v1104
    %1206 = vmatmul.f32.gmra.mxu0 %v1090
    %v1207 = vpop.f32.mrf.mxu0
    %v1208 = vadd.f32 0.0, %v1207
    %1209 = vdwg.mxu0
    %v1210 = vadd.f32 %v1101, %v1168
    %v1211 = vxor.u32 %v1210, 2147483648
    %v1212 = vmul.f32 %v1211, 1.442695
    %v1213 = vpow.pop %v1212
    %v1214 = vadd.f32 %v1213, 1.0
    %v1215 = vrcp.pop %v1214
    %v1216 = vmul.f32 %v1214, %v1215
    %v1217 = vsub.f32 1.0, %v1216
    %v1218 = vmul.f32 %v1215, %v1217
    %v1219 = vadd.f32 %v1215, %v1218
    %vm1220 = vweird.f32 %v1214
    %vm1221 = vweird.f32 %v1215
    %vm1222 = vmor %vm1220, %vm1221
    %v1223 = vsel %vm1222, %v1215, %v1219
    %v1224 = vand.u32 2147483647, %v1214
    %vm1225 = vcmp.eq.f32.partialorder %v1224, 8.507059e+37
    %v1226 = vand.u32 %v1214, 2147483648
    %v1227 = vor.u32 1.1754944e-38, %v1226
    %v1228 = vsel %vm1225, %v1227, %v1223
    %v1229 = vmul.f32 1.0, %v1228
    %v1231 = vrot.slane %v1101, 1
    %v1233 = vadd.f32 %v1231, %v1188
    %v1234 = vxor.u32 %v1233, 2147483648
    %v1235 = vmul.f32 %v1234, 1.442695
    %v1236 = vpow.pop %v1235
    %v1237 = vadd.f32 %v1236, 1.0
    %v1238 = vrcp.pop %v1237
    %v1239 = vmul.f32 %v1237, %v1238
    %v1240 = vsub.f32 1.0, %v1239
    %v1241 = vmul.f32 %v1238, %v1240
    %v1242 = vadd.f32 %v1238, %v1241
    %vm1243 = vweird.f32 %v1237
    %vm1244 = vweird.f32 %v1238
    %vm1245 = vmor %vm1243, %vm1244
    %v1246 = vsel %vm1245, %v1238, %v1242
    %v1247 = vand.u32 2147483647, %v1237
    %vm1248 = vcmp.eq.f32.partialorder %v1247, 8.507059e+37
    %v1249 = vand.u32 %v1237, 2147483648
    %v1250 = vor.u32 1.1754944e-38, %v1249
    %v1251 = vsel %vm1248, %v1250, %v1246
    %v1252 = vmul.f32 1.0, %v1251
    %v1253 = vadd.f32 %v1208, %v58
    %v1254 = vmul.f32 %v1229, %v1253
    %v1255 = vrot.slane %v1101, 2
    %v1257 = vadd.f32 %v1255, %v1254
    %v1258 = vtanh.pop %v1257
    %v1259 = vsub.f32 1.0, %v1252
    %v1260 = vmul.f32 %v1259, %v1258
    %v1261 = vmul.f32 %v1252, %v1090
    %v1262 = vadd.f32 %v1260, %v1261
    %1263 = vst [vmem:[%s5 + $0x6] sm:$0x1] %v1262
    %s1264 = sld [smem:[#allocation3 + $0x7]]
    %s1265 = sshra.s32 %s1264, 3
    %s1266 = sand.u32 %s1264, 7
    %s1267 = sshra.s32 %s1264, 3
    %s1268 = sand.u32 %s1264, 7
    %s1269 = smul.u32 %s1265, 3
    %s1270 = smul.u32 %s1269, 8
    %s1271 = sadd.s32 %s1270, %s1268
    %s1272 = scalar_lea.vmem [#allocation4], %s1271
    %v1273 = vld [vmem:[%s1272] ss:$8 sm:$0x7]
    %v1274 = vld [vmem:[#allocation6] sm:$0xff]
    %v1275 = vld [vmem:[#allocation6 + $0x8] sm:$0xff]
    %v1276 = vld [vmem:[#allocation6 + $0x10] sm:$0xff]
    %v1277 = vld [vmem:[#allocation6 + $0x18] sm:$0xff]
    %v1278 = vld [vmem:[#allocation6 + $0x20] sm:$0xff]
    %v1279 = vld [vmem:[#allocation6 + $0x28] sm:$0xff]
    %v1280 = vld [vmem:[#allocation6 + $0x30] sm:$0xff]
    %v1281 = vld [vmem:[#allocation6 + $0x38] sm:$0xff]
    %v1282 = vld [vmem:[#allocation6 + $0x40] sm:$0xff]
    %v1283 = vld [vmem:[#allocation6 + $0x48] sm:$0xff]
    %v1284 = vld [vmem:[#allocation6 + $0x50] sm:$0xff]
    %v1285 = vld [vmem:[#allocation6 + $0x58] sm:$0xff]
    %v1286 = vld [vmem:[#allocation6 + $0x60] sm:$0xff]
    %v1287 = vld [vmem:[#allocation6 + $0x68] sm:$0xff]
    %v1288 = vld [vmem:[#allocation6 + $0x70] sm:$0xff]
    %v1289 = vld [vmem:[#allocation6 + $0x78] sm:$0xff]
    %v1290 = vld [vmem:[#allocation6 + $0x80] sm:$0xff]
    %v1291 = vld [vmem:[#allocation6 + $0x88] sm:$0xff]
    %v1292 = vld [vmem:[#allocation6 + $0x90] sm:$0xff]
    %v1293 = vld [vmem:[#allocation6 + $0x98] sm:$0xff]
    %v1294 = vld [vmem:[#allocation6 + $0xa0] sm:$0xff]
    %v1295 = vld [vmem:[#allocation6 + $0xa8] sm:$0xff]
    %v1296 = vld [vmem:[#allocation6 + $0xb0] sm:$0xff]
    %v1297 = vld [vmem:[#allocation6 + $0xb8] sm:$0xff]
    %v1298 = vld [vmem:[#allocation6 + $0xc0] sm:$0xff]
    %v1299 = vld [vmem:[#allocation6 + $0xc8] sm:$0xff]
    %v1300 = vld [vmem:[#allocation6 + $0xd0] sm:$0xff]
    %v1301 = vld [vmem:[#allocation6 + $0xd8] sm:$0xff]
    %v1302 = vld [vmem:[#allocation6 + $0xe0] sm:$0xff]
    %v1303 = vld [vmem:[#allocation6 + $0xe8] sm:$0xff]
    %v1304 = vld [vmem:[#allocation6 + $0xf0] sm:$0xff]
    %v1305 = vld [vmem:[#allocation6 + $0xf8] sm:$0xff]
    %v1306 = vld [vmem:[#allocation6 + $0x100] sm:$0xff]
    %v1307 = vld [vmem:[#allocation6 + $0x108] sm:$0xff]
    %v1308 = vld [vmem:[#allocation6 + $0x110] sm:$0xff]
    %v1309 = vld [vmem:[#allocation6 + $0x118] sm:$0xff]
    %v1310 = vld [vmem:[#allocation6 + $0x120] sm:$0xff]
    %v1311 = vld [vmem:[#allocation6 + $0x128] sm:$0xff]
    %v1312 = vld [vmem:[#allocation6 + $0x130] sm:$0xff]
    %v1313 = vld [vmem:[#allocation6 + $0x138] sm:$0xff]
    %v1314 = vld [vmem:[#allocation6 + $0x140] sm:$0xff]
    %v1315 = vld [vmem:[#allocation6 + $0x148] sm:$0xff]
    %v1316 = vld [vmem:[#allocation6 + $0x150] sm:$0xff]
    %v1317 = vld [vmem:[#allocation6 + $0x158] sm:$0xff]
    %v1318 = vld [vmem:[#allocation6 + $0x160] sm:$0xff]
    %v1319 = vld [vmem:[#allocation6 + $0x168] sm:$0xff]
    %v1320 = vld [vmem:[#allocation6 + $0x170] sm:$0xff]
    %v1321 = vld [vmem:[#allocation6 + $0x178] sm:$0xff]
    %1322 = vmatpush.msra.mxu0 %v1319
    %1323 = vmatpush.msra.mxu0 %v1316
    %1324 = vmatpush.msra.mxu0 %v1313
    %1325 = vmatpush.msra.mxu0 %v1310
    %1326 = vmatpush.msra.mxu0 %v1307
    %1327 = vmatpush.msra.mxu0 %v1304
    %1328 = vmatpush.msra.mxu0 %v1301
    %1329 = vmatpush.msra.mxu0 %v1298
    %1330 = vmatpush.msra.mxu0 %v1295
    %1331 = vmatpush.msra.mxu0 %v1292
    %1332 = vmatpush.msra.mxu0 %v1289
    %1333 = vmatpush.msra.mxu0 %v1286
    %1334 = vmatpush.msra.mxu0 %v1283
    %1335 = vmatpush.msra.mxu0 %v1280
    %1336 = vmatpush.msra.mxu0 %v1277
    %1337 = vmatpush.msra.mxu0 %v1274
    %1338 = vmatmul.f32.gmra.mxu0 %v1262
    %v1339 = vpop.f32.mrf.mxu0
    %v1340 = vadd.f32 0.0, %v1339
    %1341 = vdwg.mxu0
    %1342 = vmatpush.msra.mxu0 %v1320
    %1343 = vmatpush.msra.mxu0 %v1317
    %1344 = vmatpush.msra.mxu0 %v1314
    %1345 = vmatpush.msra.mxu0 %v1311
    %1346 = vmatpush.msra.mxu0 %v1308
    %1347 = vmatpush.msra.mxu0 %v1305
    %1348 = vmatpush.msra.mxu0 %v1302
    %1349 = vmatpush.msra.mxu0 %v1299
    %1350 = vmatpush.msra.mxu0 %v1296
    %1351 = vmatpush.msra.mxu0 %v1293
    %1352 = vmatpush.msra.mxu0 %v1290
    %1353 = vmatpush.msra.mxu0 %v1287
    %1354 = vmatpush.msra.mxu0 %v1284
    %1355 = vmatpush.msra.mxu0 %v1281
    %1356 = vmatpush.msra.mxu0 %v1278
    %1357 = vmatpush.msra.mxu0 %v1275
    %1358 = vmatmul.f32.gmra.mxu0 %v1262
    %v1359 = vpop.f32.mrf.mxu0
    %v1360 = vadd.f32 0.0, %v1359
    %1361 = vdwg.mxu0
    %1362 = vmatpush.msra.mxu0 %v1321
    %1363 = vmatpush.msra.mxu0 %v1318
    %1364 = vmatpush.msra.mxu0 %v1315
    %1365 = vmatpush.msra.mxu0 %v1312
    %1366 = vmatpush.msra.mxu0 %v1309
    %1367 = vmatpush.msra.mxu0 %v1306
    %1368 = vmatpush.msra.mxu0 %v1303
    %1369 = vmatpush.msra.mxu0 %v1300
    %1370 = vmatpush.msra.mxu0 %v1297
    %1371 = vmatpush.msra.mxu0 %v1294
    %1372 = vmatpush.msra.mxu0 %v1291
    %1373 = vmatpush.msra.mxu0 %v1288
    %1374 = vmatpush.msra.mxu0 %v1285
    %1375 = vmatpush.msra.mxu0 %v1282
    %1376 = vmatpush.msra.mxu0 %v1279
    %1377 = vmatpush.msra.mxu0 %v1276
    %1378 = vmatmul.f32.gmra.mxu0 %v1262
    %v1379 = vpop.f32.mrf.mxu0
    %v1380 = vadd.f32 0.0, %v1379
    %1381 = vdwg.mxu0
    %v1382 = vadd.f32 %v1273, %v1340
    %v1383 = vxor.u32 %v1382, 2147483648
    %v1384 = vmul.f32 %v1383, 1.442695
    %v1385 = vpow.pop %v1384
    %v1386 = vadd.f32 %v1385, 1.0
    %v1387 = vrcp.pop %v1386
    %v1388 = vmul.f32 %v1386, %v1387
    %v1389 = vsub.f32 1.0, %v1388
    %v1390 = vmul.f32 %v1387, %v1389
    %v1391 = vadd.f32 %v1387, %v1390
    %vm1392 = vweird.f32 %v1386
    %vm1393 = vweird.f32 %v1387
    %vm1394 = vmor %vm1392, %vm1393
    %v1395 = vsel %vm1394, %v1387, %v1391
    %v1396 = vand.u32 2147483647, %v1386
    %vm1397 = vcmp.eq.f32.partialorder %v1396, 8.507059e+37
    %v1398 = vand.u32 %v1386, 2147483648
    %v1399 = vor.u32 1.1754944e-38, %v1398
    %v1400 = vsel %vm1397, %v1399, %v1395
    %v1401 = vmul.f32 1.0, %v1400
    %v1403 = vrot.slane %v1273, 1
    %v1405 = vadd.f32 %v1403, %v1360
    %v1406 = vxor.u32 %v1405, 2147483648
    %v1407 = vmul.f32 %v1406, 1.442695
    %v1408 = vpow.pop %v1407
    %v1409 = vadd.f32 %v1408, 1.0
    %v1410 = vrcp.pop %v1409
    %v1411 = vmul.f32 %v1409, %v1410
    %v1412 = vsub.f32 1.0, %v1411
    %v1413 = vmul.f32 %v1410, %v1412
    %v1414 = vadd.f32 %v1410, %v1413
    %vm1415 = vweird.f32 %v1409
    %vm1416 = vweird.f32 %v1410
    %vm1417 = vmor %vm1415, %vm1416
    %v1418 = vsel %vm1417, %v1410, %v1414
    %v1419 = vand.u32 2147483647, %v1409
    %vm1420 = vcmp.eq.f32.partialorder %v1419, 8.507059e+37
    %v1421 = vand.u32 %v1409, 2147483648
    %v1422 = vor.u32 1.1754944e-38, %v1421
    %v1423 = vsel %vm1420, %v1422, %v1418
    %v1424 = vmul.f32 1.0, %v1423
    %v1425 = vadd.f32 %v1380, %v58
    %v1426 = vmul.f32 %v1401, %v1425
    %v1427 = vrot.slane %v1273, 2
    %v1429 = vadd.f32 %v1427, %v1426
    %v1430 = vtanh.pop %v1429
    %v1431 = vsub.f32 1.0, %v1424
    %v1432 = vmul.f32 %v1431, %v1430
    %v1433 = vmul.f32 %v1424, %v1262
    %v1434 = vadd.f32 %v1432, %v1433
    %1435 = vst [vmem:[%s5 + $0x7] sm:$0x1] %v1434
    // Predicated region
    $region26: #{encoder_rnn_encode.1} parent=1 // pred_check
      _
    $region27: #{encoder_rnn_encode.1} parent=1 // pred_check_branch
      %1437 = sbr.rel (0) target = $region29
    $region28: #{encoder_rnn_encode.1} parent=1 // pred_region
      _
    $region29: #{encoder_rnn_encode.1} parent=1 // pred_fallthru
      _
    // Predicated region
    $region30: #{encoder_rnn_encode.1} parent=1 // pred_check
      _
    $region31: #{encoder_rnn_encode.1} parent=1 // pred_check_branch
      %1439 = sbr.rel (0) target = $region33
    $region32: #{encoder_rnn_encode.1} parent=1 // pred_region
      _
    $region33: #{encoder_rnn_encode.1} parent=1 // pred_fallthru
      _
    %1440 = vsyncpa [#allocation5], 1
    %1441 = vsyncpa [#allocation7], 1

</llo_original>
